<compile_context>
chip_gen: v5e
topology: v5e:2x2
jax: 0.10.0
libtpu: 0.0.40
codegen_flags: <defaults>
</compile_context>

<pallas_src>
import functools

import jax
import jax.numpy as jnp
from jax.experimental import pallas as pl
from jax.experimental.pallas import tpu as pltpu


def _mlp_kernel(x_ref, w1_ref, b1_ref, w2_ref, b2_ref, w3_ref, b3_ref, o_ref):
    # Cast the activation tile to bf16 on the VPU (free under MXU); weights arrive bf16.
    x = x_ref[...].astype(jnp.bfloat16)

    # Layer 1: Linear + ReLU   (Dropout(0.5) == identity in eval mode)
    h1 = jnp.dot(x, w1_ref[...], preferred_element_type=jnp.float32) + b1_ref[...]
    h1 = jnp.maximum(h1, 0.0).astype(jnp.bfloat16)

    # Layer 2: Linear + ReLU   (Dropout(0.5) == identity in eval mode)
    h2 = jnp.dot(h1, w2_ref[...], preferred_element_type=jnp.float32) + b2_ref[...]
    h2 = jnp.maximum(h2, 0.0).astype(jnp.bfloat16)

    # Output layer: Linear (no activation), emitted in o_ref's dtype (f32)
    out = jnp.dot(h2, w3_ref[...], preferred_element_type=jnp.float32) + b3_ref[...]
    o_ref[...] = out.astype(o_ref.dtype)


@functools.partial(jax.jit, static_argnames=("block_b",))
def model_id_forward(x, w1, b1, w2, b2, w3, b3, *, block_b=512):
    """Forward pass.

    x: (B, in_f) f32 (or bf16). Weights (in, out) expected bf16 (converted once at
    init); biases (1, out) f32.
    """
    B, in_f = x.shape
    h1_f = w1.shape[1]
    h2_f = w2.shape[1]
    out_f = w3.shape[1]

    # No-op when the caller already converted at init time (the recommended path).
    w1 = w1.astype(jnp.bfloat16)
    w2 = w2.astype(jnp.bfloat16)
    w3 = w3.astype(jnp.bfloat16)

    # Lane-dense output: pad N of the last layer to a multiple of 128 if needed.
    out_f_pad = ((out_f + 127) // 128) * 128
    if out_f_pad != out_f:
        w3 = jnp.pad(w3, ((0, 0), (0, out_f_pad - out_f)))
        b3 = jnp.pad(b3, ((0, 0), (0, out_f_pad - out_f)))

    # Batch tile: 512 rows (256-aligned M-tile) for large batches; small batches round
    # up to a multiple of 16 (bf16 packs two rows per sublane).
    if B >= block_b:
        TB = block_b
    else:
        TB = ((B + 15) // 16) * 16
    B_pad = ((B + TB - 1) // TB) * TB
    if B_pad != B:
        x = jnp.pad(x, ((0, B_pad - B), (0, 0)))
    n_blocks = B_pad // TB

    # Weight / bias blocks are the full arrays and return block (0,0) for every grid
    # step -> loaded once, resident in VMEM across the batch grid. Buffered(1): no
    # pointless double-buffering of resident blocks.
    def resident(shape):
        return pl.BlockSpec(shape, lambda i: (0, 0), pipeline_mode=pl.Buffered(1))

    x_bytes = B_pad * in_f * x.dtype.itemsize
    flops = 2 * B_pad * (in_f * h1_f + h1_f * h2_f + h2_f * out_f_pad)
    bytes_accessed = (
        2 * (in_f * h1_f + h1_f * h2_f + h2_f * out_f_pad)   # bf16 weights
        + x_bytes                                            # activations in (native dtype)
        + 4 * B_pad * out_f_pad                              # f32 output
        + 4 * (h1_f + h2_f + out_f_pad)                      # f32 biases
    )

    out_padded = pl.pallas_call(
        _mlp_kernel,
        out_shape=jax.ShapeDtypeStruct((B_pad, out_f_pad), jnp.float32),
        grid=(n_blocks,),
        in_specs=[
            pl.BlockSpec((TB, in_f), lambda i: (i, 0)),   # x: tiled over batch
            resident(w1.shape), resident(b1.shape),
            resident(w2.shape), resident(b2.shape),
            resident(w3.shape), resident(b3.shape),
        ],
        out_specs=pl.BlockSpec((TB, out_f_pad), lambda i: (i, 0)),
        compiler_params=pltpu.CompilerParams(
            dimension_semantics=("parallel",),
        ),
        cost_estimate=pl.CostEstimate(
            flops=flops, transcendentals=0, bytes_accessed=bytes_accessed
        ),
    )(x, w1, b1, w2, b2, w3, b3)

    return out_padded[:B, :out_f]


def init_linear_params(key, fan_in, fan_out):
    """Deterministic init mimicking nn.Linear's uniform(-1/sqrt(fan_in), 1/sqrt(fan_in))."""
    kw, kb = jax.random.split(key)
    bound = 1.0 / jnp.sqrt(jnp.float32(fan_in))
    # Stored as (in, out) so the kernel computes x @ W.
    w = jax.random.uniform(kw, (fan_in, fan_out), jnp.float32, -bound, bound)
    b = jax.random.uniform(kb, (1, fan_out), jnp.float32, -bound, bound)
    return w, b


if __name__ == "__main__":
    key = jax.random.PRNGKey(0)
    k_x, k1, k2, k3 = jax.random.split(key, 4)

    # Small, module-consistent shapes.
    batch = 8
    in_layers = 256
    out_layers = 128

    x = jax.random.normal(k_x, (batch, in_layers), jnp.float32)

    w1, b1 = init_linear_params(k1, in_layers, 1024)
    w2, b2 = init_linear_params(k2, 1024, 512)
    w3, b3 = init_linear_params(k3, 512, out_layers)

    # Convert weights to bf16 ONCE at init time (outside the jitted forward), so each
    # call does not pay an extra HBM pass re-casting them.
    w1_bf = jax.device_put(w1.astype(jnp.bfloat16))
    w2_bf = jax.device_put(w2.astype(jnp.bfloat16))
    w3_bf = jax.device_put(w3.astype(jnp.bfloat16))

    out = model_id_forward(x, w1_bf, b1, w2_bf, b2, w3_bf, b3)
    out = jax.block_until_ready(out)
    assert out.shape == (batch, out_layers)

    # Reference 1: plain JAX with the same bf16-operand / f32-accumulate recipe
    # (should match the kernel closely).
    xb = x.astype(jnp.bfloat16)
    r = jnp.maximum(jnp.dot(xb, w1_bf, preferred_element_type=jnp.float32) + b1, 0.0)
    r = jnp.maximum(jnp.dot(r.astype(jnp.bfloat16), w2_bf, preferred_element_type=jnp.float32) + b2, 0.0)
    ref_bf16 = jnp.dot(r.astype(jnp.bfloat16), w3_bf, preferred_element_type=jnp.float32) + b3
    assert jnp.allclose(out, ref_bf16, atol=2e-2, rtol=2e-2)

    # Reference 2: full-f32 reference — looser tolerance (bf16 weight rounding).
    ref_f32 = jnp.maximum(x @ w1 + b1, 0.0)
    ref_f32 = jnp.maximum(ref_f32 @ w2 + b2, 0.0)
    ref_f32 = ref_f32 @ w3 + b3
    assert jnp.allclose(out, ref_f32, atol=1e-1, rtol=1e-1)

    print("KERNEL_OK")
</pallas_src>

<mosaic_0001>
module attributes {stable_mosaic.version = 11 : i64} {
  func.func @_mlp_kernel(%arg0: i32, %arg1: memref<16x256xf32, #tpu.memory_space<vmem>>, %arg2: memref<256x1024xbf16, #tpu.memory_space<vmem>>, %arg3: memref<1x1024xf32, #tpu.memory_space<vmem>>, %arg4: memref<1024x512xbf16, #tpu.memory_space<vmem>>, %arg5: memref<1x512xf32, #tpu.memory_space<vmem>>, %arg6: memref<512x128xbf16, #tpu.memory_space<vmem>>, %arg7: memref<1x128xf32, #tpu.memory_space<vmem>>, %arg8: memref<16x128xf32, #tpu.memory_space<vmem>>) attributes {dimension_semantics = [#tpu.dimension_semantics<parallel>], iteration_bounds = array<i64: 1>, scalar_prefetch = 0 : i64, scratch_operands = 0 : i64, tpu.core_type = #tpu.core_type<tc>, window_params = [{transform_indices = @transform_0, window_bounds = array<i64: 16, 256>}, {pipeline_mode = #tpu.pipeline_mode<synchronous>, transform_indices = @transform_1, window_bounds = array<i64: 256, 1024>}, {pipeline_mode = #tpu.pipeline_mode<synchronous>, transform_indices = @transform_2, window_bounds = array<i64: 1, 1024>}, {pipeline_mode = #tpu.pipeline_mode<synchronous>, transform_indices = @transform_3, window_bounds = array<i64: 1024, 512>}, {pipeline_mode = #tpu.pipeline_mode<synchronous>, transform_indices = @transform_4, window_bounds = array<i64: 1, 512>}, {pipeline_mode = #tpu.pipeline_mode<synchronous>, transform_indices = @transform_5, window_bounds = array<i64: 512, 128>}, {pipeline_mode = #tpu.pipeline_mode<synchronous>, transform_indices = @transform_6, window_bounds = array<i64: 1, 128>}, {transform_indices = @transform_7, window_bounds = array<i64: 16, 128>}]} {
    %c0 = arith.constant 0 : index
    %c0_0 = arith.constant 0 : index
    %0 = vector.load %arg1[%c0, %c0_0] : memref<16x256xf32, #tpu.memory_space<vmem>>, vector<16x256xf32>
    %1 = arith.truncf %0 : vector<16x256xf32> to vector<16x256xbf16>
    %c0_1 = arith.constant 0 : index
    %c0_2 = arith.constant 0 : index
    %2 = vector.load %arg2[%c0_1, %c0_2] : memref<256x1024xbf16, #tpu.memory_space<vmem>>, vector<256x1024xbf16>
    %cst = arith.constant dense<0.000000e+00> : vector<16x1024xf32>
    %3 = tpu.matmul %1, %2, %cst {dimension_numbers = #tpu.dot_dimension_numbers<[1], [0], [0], [1], [0, 0, 1, 1], [], []>} : vector<16x256xbf16>, vector<256x1024xbf16>, vector<16x1024xf32> -> vector<16x1024xf32>
    %c0_3 = arith.constant 0 : index
    %c0_4 = arith.constant 0 : index
    %4 = vector.load %arg3[%c0_3, %c0_4] : memref<1x1024xf32, #tpu.memory_space<vmem>>, vector<1x1024xf32>
    %5 = vector.broadcast %4 : vector<1x1024xf32> to vector<16x1024xf32>
    %6 = arith.addf %3, %5 : vector<16x1024xf32>
    %cst_5 = arith.constant 0.000000e+00 : f32
    %7 = vector.broadcast %cst_5 : f32 to vector<16x1024xf32>
    %8 = arith.maximumf %6, %7 : vector<16x1024xf32>
    %9 = arith.truncf %8 : vector<16x1024xf32> to vector<16x1024xbf16>
    %c0_6 = arith.constant 0 : index
    %c0_7 = arith.constant 0 : index
    %10 = vector.load %arg4[%c0_6, %c0_7] : memref<1024x512xbf16, #tpu.memory_space<vmem>>, vector<1024x512xbf16>
    %cst_8 = arith.constant dense<0.000000e+00> : vector<16x512xf32>
    %11 = tpu.matmul %9, %10, %cst_8 {dimension_numbers = #tpu.dot_dimension_numbers<[1], [0], [0], [1], [0, 0, 1, 1], [], []>} : vector<16x1024xbf16>, vector<1024x512xbf16>, vector<16x512xf32> -> vector<16x512xf32>
    %c0_9 = arith.constant 0 : index
    %c0_10 = arith.constant 0 : index
    %12 = vector.load %arg5[%c0_9, %c0_10] : memref<1x512xf32, #tpu.memory_space<vmem>>, vector<1x512xf32>
    %13 = vector.broadcast %12 : vector<1x512xf32> to vector<16x512xf32>
    %14 = arith.addf %11, %13 : vector<16x512xf32>
    %cst_11 = arith.constant 0.000000e+00 : f32
    %15 = vector.broadcast %cst_11 : f32 to vector<16x512xf32>
    %16 = arith.maximumf %14, %15 : vector<16x512xf32>
    %17 = arith.truncf %16 : vector<16x512xf32> to vector<16x512xbf16>
    %c0_12 = arith.constant 0 : index
    %c0_13 = arith.constant 0 : index
    %18 = vector.load %arg6[%c0_12, %c0_13] : memref<512x128xbf16, #tpu.memory_space<vmem>>, vector<512x128xbf16>
    %cst_14 = arith.constant dense<0.000000e+00> : vector<16x128xf32>
    %19 = tpu.matmul %17, %18, %cst_14 {dimension_numbers = #tpu.dot_dimension_numbers<[1], [0], [0], [1], [0, 0, 1, 1], [], []>} : vector<16x512xbf16>, vector<512x128xbf16>, vector<16x128xf32> -> vector<16x128xf32>
    %c0_15 = arith.constant 0 : index
    %c0_16 = arith.constant 0 : index
    %20 = vector.load %arg7[%c0_15, %c0_16] : memref<1x128xf32, #tpu.memory_space<vmem>>, vector<1x128xf32>
    %21 = vector.broadcast %20 : vector<1x128xf32> to vector<16x128xf32>
    %22 = arith.addf %19, %21 : vector<16x128xf32>
    %c0_17 = arith.constant 0 : index
    %c0_18 = arith.constant 0 : index
    %23 = vector.load %arg8[%c0_17, %c0_18] : memref<16x128xf32, #tpu.memory_space<vmem>>, vector<16x128xf32>
    tpu.vector_store %arg8[%c0_17, %c0_18], %22 {strides = array<i32>} : memref<16x128xf32, #tpu.memory_space<vmem>>, vector<16x128xf32>,
    return
  }
  func.func @transform_0(%arg0: i32) -> (i32, i32) {
    %c0_i32 = arith.constant 0 : i32
    %c0_i32_0 = arith.constant 0 : i32
    return %arg0, %c0_i32 : i32, i32
  }
  func.func @transform_1(%arg0: i32) -> (i32, i32) {
    %c0_i32 = arith.constant 0 : i32
    %c0_i32_0 = arith.constant 0 : i32
    %c0_i32_1 = arith.constant 0 : i32
    return %c0_i32, %c0_i32_0 : i32, i32
  }
  func.func @transform_2(%arg0: i32) -> (i32, i32) {
    %c0_i32 = arith.constant 0 : i32
    %c0_i32_0 = arith.constant 0 : i32
    %c0_i32_1 = arith.constant 0 : i32
    return %c0_i32, %c0_i32_0 : i32, i32
  }
  func.func @transform_3(%arg0: i32) -> (i32, i32) {
    %c0_i32 = arith.constant 0 : i32
    %c0_i32_0 = arith.constant 0 : i32
    %c0_i32_1 = arith.constant 0 : i32
    return %c0_i32, %c0_i32_0 : i32, i32
  }
  func.func @transform_4(%arg0: i32) -> (i32, i32) {
    %c0_i32 = arith.constant 0 : i32
    %c0_i32_0 = arith.constant 0 : i32
    %c0_i32_1 = arith.constant 0 : i32
    return %c0_i32, %c0_i32_0 : i32, i32
  }
  func.func @transform_5(%arg0: i32) -> (i32, i32) {
    %c0_i32 = arith.constant 0 : i32
    %c0_i32_0 = arith.constant 0 : i32
    %c0_i32_1 = arith.constant 0 : i32
    return %c0_i32, %c0_i32_0 : i32, i32
  }
  func.func @transform_6(%arg0: i32) -> (i32, i32) {
    %c0_i32 = arith.constant 0 : i32
    %c0_i32_0 = arith.constant 0 : i32
    %c0_i32_1 = arith.constant 0 : i32
    return %c0_i32, %c0_i32_0 : i32, i32
  }
  func.func @transform_7(%arg0: i32) -> (i32, i32) {
    %c0_i32 = arith.constant 0 : i32
    %c0_i32_0 = arith.constant 0 : i32
    return %arg0, %c0_i32 : i32, i32
  }
}

</mosaic_0001>

<llo_original>
// kernel: model_id_forward.1
$region0: #{model_id_forward.1}
  #allocation0 [shape = 'u32[]', space=smem, size = 0x4, offset = 0x4, fixed_abs, tag = 'smem constant byte address 0x4 - core index']
  #allocation1 [shape = 'u32[72,128]{1,0:T(1,128)}', space=vmem, size = 0x9000, scoped, tag = 'internal scratch']
  %s0 = inlined_call_operand.vmem [shape: f32[16,256], index: 0, kind: input, shape index: {}]
  %s1 = inlined_call_operand.hbm [shape: bf16[256,1024], index: 1, kind: input, shape index: {}]
  %s2 = inlined_call_operand.vmem [shape: f32[1,1024], index: 2, kind: input, shape index: {}]
  %s3 = inlined_call_operand.hbm [shape: bf16[1024,512], index: 3, kind: input, shape index: {}]
  %s4 = inlined_call_operand.vmem [shape: f32[1,512], index: 4, kind: input, shape index: {}]
  %s5 = inlined_call_operand.hbm [shape: bf16[512,128], index: 5, kind: input, shape index: {}]
  %s6 = inlined_call_operand.vmem [shape: f32[1,128], index: 6, kind: input, shape index: {}]
  %s7 = inlined_call_operand.vmem [shape: f32[16,128], index: 7, kind: output, shape index: {}]
  %s8 = sld [smem:[#allocation0]]
  $region50: #{model_id_forward.1} parent=0
    _
  %s10 = ssub.s32 1, %s8
  %s11 = scalar_select 0, %s10, %s8
  $region1: #{model_id_forward.1} parent=0
    #allocation2 [shape = 'u8[524288]{0}', space=vmem, size = 0x80000, scoped, tag = 'input window, operand 1, single buffered']
    #allocation3 [shape = 's32[1]{0}', space=sflag, size = 0x4, scoped, tag = 'scoped memory for model_id_forward.1']
    #allocation4 [shape = 'u8[1048576]{0}', space=vmem, size = 0x100000, scoped, tag = 'input window, operand 3, single buffered']
    #allocation5 [shape = 's32[1]{0}', space=sflag, size = 0x4, scoped, tag = 'scoped memory for model_id_forward.1']
    #allocation6 [shape = 'u8[131072]{0}', space=vmem, size = 0x20000, scoped, tag = 'input window, operand 5, single buffered']
    %12 = vsyncpa [#allocation3], 0
    %13 = vsyncpa [#allocation5], 0
    // Predicated region
    $region2: #{model_id_forward.1} parent=1 // pred_check
      _
    $region3: #{model_id_forward.1} parent=1 // pred_check_branch
      %15 = sbr.rel (0) target = $region5
    $region4: #{model_id_forward.1} parent=1 // pred_region
      _
    $region5: #{model_id_forward.1} parent=1 // pred_fallthru
      _
    // Predicated region
    $region6: #{model_id_forward.1} parent=1 // pred_check
      _
    $region7: #{model_id_forward.1} parent=1 // pred_check_branch
      %17 = sbr.rel (0) target = $region9
    $region8: #{model_id_forward.1} parent=1 // pred_region
      %19 = vsyncadd [#allocation3], 0
      %s20 = sshll.u32 %s1, 4
      %s21 = int_to_ptr.hbm [resolvable:$true] %s20
      %s22 = sshll.u32 [#allocation2], 4
      %s23 = int_to_ptr.vmem [resolvable:$true] %s22
      %28 = dma.hbm_to_vmem [thread:$0]  %s21, 16384, %s23, [#allocation3], 512, 512, 32
    $region9: #{model_id_forward.1} parent=1 // pred_fallthru
      _
    // Predicated region
    $region10: #{model_id_forward.1} parent=1 // pred_check
      _
    $region11: #{model_id_forward.1} parent=1 // pred_check_branch
      %30 = sbr.rel (0) target = $region13
    $region12: #{model_id_forward.1} parent=1 // pred_region
      _
    $region13: #{model_id_forward.1} parent=1 // pred_fallthru
      _
    // Predicated region
    $region14: #{model_id_forward.1} parent=1 // pred_check
      _
    $region15: #{model_id_forward.1} parent=1 // pred_check_branch
      %32 = sbr.rel (0) target = $region17
    $region16: #{model_id_forward.1} parent=1 // pred_region
      %34 = vsyncadd [#allocation5], 0
      %s35 = sshll.u32 %s3, 4
      %s36 = int_to_ptr.hbm [resolvable:$true] %s35
      %s37 = sshll.u32 [#allocation4], 4
      %s38 = int_to_ptr.vmem [resolvable:$true] %s37
      %43 = dma.hbm_to_vmem [thread:$0]  %s36, 32768, %s38, [#allocation5], 256, 256, 16
    $region17: #{model_id_forward.1} parent=1 // pred_fallthru
      _
    // Predicated region
    $region18: #{model_id_forward.1} parent=1 // pred_check
      _
    $region19: #{model_id_forward.1} parent=1 // pred_check_branch
      %45 = sbr.rel (0) target = $region21
    $region20: #{model_id_forward.1} parent=1 // pred_region
      _
    $region21: #{model_id_forward.1} parent=1 // pred_fallthru
      _
    // Predicated region
    $region22: #{model_id_forward.1} parent=1 // pred_check
      _
    $region23: #{model_id_forward.1} parent=1 // pred_check_branch
      %47 = sbr.rel (0) target = $region25
    $region24: #{model_id_forward.1} parent=1 // pred_region
      %49 = vsyncadd [#allocation5], 0
      %s50 = sshll.u32 %s5, 4
      %s51 = int_to_ptr.hbm [resolvable:$true] %s50
      %s52 = sshll.u32 [#allocation6], 4
      %s53 = int_to_ptr.vmem [resolvable:$true] %s52
      %58 = dma.hbm_to_vmem [thread:$0]  %s51, 4096, %s53, [#allocation5], 64, 64, 4
    $region25: #{model_id_forward.1} parent=1 // pred_fallthru
      _
    // Predicated region
    $region26: #{model_id_forward.1} parent=1 // pred_check
      _
    $region27: #{model_id_forward.1} parent=1 // pred_check_branch
      %60 = sbr.rel (0) target = $region29
    $region28: #{model_id_forward.1} parent=1 // pred_region
      _
    $region29: #{model_id_forward.1} parent=1 // pred_fallthru
      _
    // Predicated region
    $region30: #{model_id_forward.1} parent=1 // pred_check
      _
    $region31: #{model_id_forward.1} parent=1 // pred_check_branch
      %62 = sbr.rel (0) target = $region33
    $region32: #{model_id_forward.1} parent=1 // pred_region
      %64 = dma.done [#allocation3], 16384
    $region33: #{model_id_forward.1} parent=1 // pred_fallthru
      _
    // Predicated region
    $region34: #{model_id_forward.1} parent=1 // pred_check
      _
    $region35: #{model_id_forward.1} parent=1 // pred_check_branch
      %66 = sbr.rel (0) target = $region37
    $region36: #{model_id_forward.1} parent=1 // pred_region
      %68 = dma.done [#allocation5], 32768
    $region37: #{model_id_forward.1} parent=1 // pred_fallthru
      _
    // Predicated region
    $region38: #{model_id_forward.1} parent=1 // pred_check
      _
    $region39: #{model_id_forward.1} parent=1 // pred_check_branch
      %70 = sbr.rel (0) target = $region41
    $region40: #{model_id_forward.1} parent=1 // pred_region
      %72 = dma.done [#allocation5], 4096
    $region41: #{model_id_forward.1} parent=1 // pred_fallthru
      _
    %v73 = vld [vmem:[%s0] sm:$0xff]
    %v74 = vld [vmem:[%s0 + $0x8] sm:$0xff]
    %v75 = vld [vmem:[%s0 + $0x10] sm:$0xff]
    %v76 = vld [vmem:[%s0 + $0x18] sm:$0xff]
    %v77 = vpack.c.bf16 %v75, %v73
    %v78 = vpack.c.bf16 %v76, %v74
    %v79 = vld [vmem:[#allocation2] sm:$0xff]
    %v80 = vld [vmem:[#allocation2 + $0x8] sm:$0xff]
    %v81 = vld [vmem:[#allocation2 + $0x10] sm:$0xff]
    %v82 = vld [vmem:[#allocation2 + $0x18] sm:$0xff]
    %v83 = vld [vmem:[#allocation2 + $0x20] sm:$0xff]
    %v84 = vld [vmem:[#allocation2 + $0x28] sm:$0xff]
    %v85 = vld [vmem:[#allocation2 + $0x30] sm:$0xff]
    %v86 = vld [vmem:[#allocation2 + $0x38] sm:$0xff]
    %v87 = vld [vmem:[#allocation2 + $0x40] sm:$0xff]
    %v88 = vld [vmem:[#allocation2 + $0x48] sm:$0xff]
    %v89 = vld [vmem:[#allocation2 + $0x50] sm:$0xff]
    %v90 = vld [vmem:[#allocation2 + $0x58] sm:$0xff]
    %v91 = vld [vmem:[#allocation2 + $0x60] sm:$0xff]
    %v92 = vld [vmem:[#allocation2 + $0x68] sm:$0xff]
    %v93 = vld [vmem:[#allocation2 + $0x70] sm:$0xff]
    %v94 = vld [vmem:[#allocation2 + $0x78] sm:$0xff]
    %v95 = vld [vmem:[#allocation2 + $0x80] sm:$0xff]
    %v96 = vld [vmem:[#allocation2 + $0x88] sm:$0xff]
    %v97 = vld [vmem:[#allocation2 + $0x90] sm:$0xff]
    %v98 = vld [vmem:[#allocation2 + $0x98] sm:$0xff]
    %v99 = vld [vmem:[#allocation2 + $0xa0] sm:$0xff]
    %v100 = vld [vmem:[#allocation2 + $0xa8] sm:$0xff]
    %v101 = vld [vmem:[#allocation2 + $0xb0] sm:$0xff]
    %v102 = vld [vmem:[#allocation2 + $0xb8] sm:$0xff]
    %v103 = vld [vmem:[#allocation2 + $0xc0] sm:$0xff]
    %v104 = vld [vmem:[#allocation2 + $0xc8] sm:$0xff]
    %v105 = vld [vmem:[#allocation2 + $0xd0] sm:$0xff]
    %v106 = vld [vmem:[#allocation2 + $0xd8] sm:$0xff]
    %v107 = vld [vmem:[#allocation2 + $0xe0] sm:$0xff]
    %v108 = vld [vmem:[#allocation2 + $0xe8] sm:$0xff]
    %v109 = vld [vmem:[#allocation2 + $0xf0] sm:$0xff]
    %v110 = vld [vmem:[#allocation2 + $0xf8] sm:$0xff]
    %v111 = vld [vmem:[#allocation2 + $0x100] sm:$0xff]
    %v112 = vld [vmem:[#allocation2 + $0x108] sm:$0xff]
    %v113 = vld [vmem:[#allocation2 + $0x110] sm:$0xff]
    %v114 = vld [vmem:[#allocation2 + $0x118] sm:$0xff]
    %v115 = vld [vmem:[#allocation2 + $0x120] sm:$0xff]
    %v116 = vld [vmem:[#allocation2 + $0x128] sm:$0xff]
    %v117 = vld [vmem:[#allocation2 + $0x130] sm:$0xff]
    %v118 = vld [vmem:[#allocation2 + $0x138] sm:$0xff]
    %v119 = vld [vmem:[#allocation2 + $0x140] sm:$0xff]
    %v120 = vld [vmem:[#allocation2 + $0x148] sm:$0xff]
    %v121 = vld [vmem:[#allocation2 + $0x150] sm:$0xff]
    %v122 = vld [vmem:[#allocation2 + $0x158] sm:$0xff]
    %v123 = vld [vmem:[#allocation2 + $0x160] sm:$0xff]
    %v124 = vld [vmem:[#allocation2 + $0x168] sm:$0xff]
    %v125 = vld [vmem:[#allocation2 + $0x170] sm:$0xff]
    %v126 = vld [vmem:[#allocation2 + $0x178] sm:$0xff]
    %v127 = vld [vmem:[#allocation2 + $0x180] sm:$0xff]
    %v128 = vld [vmem:[#allocation2 + $0x188] sm:$0xff]
    %v129 = vld [vmem:[#allocation2 + $0x190] sm:$0xff]
    %v130 = vld [vmem:[#allocation2 + $0x198] sm:$0xff]
    %v131 = vld [vmem:[#allocation2 + $0x1a0] sm:$0xff]
    %v132 = vld [vmem:[#allocation2 + $0x1a8] sm:$0xff]
    %v133 = vld [vmem:[#allocation2 + $0x1b0] sm:$0xff]
    %v134 = vld [vmem:[#allocation2 + $0x1b8] sm:$0xff]
    %v135 = vld [vmem:[#allocation2 + $0x1c0] sm:$0xff]
    %v136 = vld [vmem:[#allocation2 + $0x1c8] sm:$0xff]
    %v137 = vld [vmem:[#allocation2 + $0x1d0] sm:$0xff]
    %v138 = vld [vmem:[#allocation2 + $0x1d8] sm:$0xff]
    %v139 = vld [vmem:[#allocation2 + $0x1e0] sm:$0xff]
    %v140 = vld [vmem:[#allocation2 + $0x1e8] sm:$0xff]
    %v141 = vld [vmem:[#allocation2 + $0x1f0] sm:$0xff]
    %v142 = vld [vmem:[#allocation2 + $0x1f8] sm:$0xff]
    %v143 = vld [vmem:[#allocation2 + $0x200] sm:$0xff]
    %v144 = vld [vmem:[#allocation2 + $0x208] sm:$0xff]
    %v145 = vld [vmem:[#allocation2 + $0x210] sm:$0xff]
    %v146 = vld [vmem:[#allocation2 + $0x218] sm:$0xff]
    %v147 = vld [vmem:[#allocation2 + $0x220] sm:$0xff]
    %v148 = vld [vmem:[#allocation2 + $0x228] sm:$0xff]
    %v149 = vld [vmem:[#allocation2 + $0x230] sm:$0xff]
    %v150 = vld [vmem:[#allocation2 + $0x238] sm:$0xff]
    %v151 = vld [vmem:[#allocation2 + $0x240] sm:$0xff]
    %v152 = vld [vmem:[#allocation2 + $0x248] sm:$0xff]
    %v153 = vld [vmem:[#allocation2 + $0x250] sm:$0xff]
    %v154 = vld [vmem:[#allocation2 + $0x258] sm:$0xff]
    %v155 = vld [vmem:[#allocation2 + $0x260] sm:$0xff]
    %v156 = vld [vmem:[#allocation2 + $0x268] sm:$0xff]
    %v157 = vld [vmem:[#allocation2 + $0x270] sm:$0xff]
    %v158 = vld [vmem:[#allocation2 + $0x278] sm:$0xff]
    %v159 = vld [vmem:[#allocation2 + $0x280] sm:$0xff]
    %v160 = vld [vmem:[#allocation2 + $0x288] sm:$0xff]
    %v161 = vld [vmem:[#allocation2 + $0x290] sm:$0xff]
    %v162 = vld [vmem:[#allocation2 + $0x298] sm:$0xff]
    %v163 = vld [vmem:[#allocation2 + $0x2a0] sm:$0xff]
    %v164 = vld [vmem:[#allocation2 + $0x2a8] sm:$0xff]
    %v165 = vld [vmem:[#allocation2 + $0x2b0] sm:$0xff]
    %v166 = vld [vmem:[#allocation2 + $0x2b8] sm:$0xff]
    %v167 = vld [vmem:[#allocation2 + $0x2c0] sm:$0xff]
    %v168 = vld [vmem:[#allocation2 + $0x2c8] sm:$0xff]
    %v169 = vld [vmem:[#allocation2 + $0x2d0] sm:$0xff]
    %v170 = vld [vmem:[#allocation2 + $0x2d8] sm:$0xff]
    %v171 = vld [vmem:[#allocation2 + $0x2e0] sm:$0xff]
    %v172 = vld [vmem:[#allocation2 + $0x2e8] sm:$0xff]
    %v173 = vld [vmem:[#allocation2 + $0x2f0] sm:$0xff]
    %v174 = vld [vmem:[#allocation2 + $0x2f8] sm:$0xff]
    %v175 = vld [vmem:[#allocation2 + $0x300] sm:$0xff]
    %v176 = vld [vmem:[#allocation2 + $0x308] sm:$0xff]
    %v177 = vld [vmem:[#allocation2 + $0x310] sm:$0xff]
    %v178 = vld [vmem:[#allocation2 + $0x318] sm:$0xff]
    %v179 = vld [vmem:[#allocation2 + $0x320] sm:$0xff]
    %v180 = vld [vmem:[#allocation2 + $0x328] sm:$0xff]
    %v181 = vld [vmem:[#allocation2 + $0x330] sm:$0xff]
    %v182 = vld [vmem:[#allocation2 + $0x338] sm:$0xff]
    %v183 = vld [vmem:[#allocation2 + $0x340] sm:$0xff]
    %v184 = vld [vmem:[#allocation2 + $0x348] sm:$0xff]
    %v185 = vld [vmem:[#allocation2 + $0x350] sm:$0xff]
    %v186 = vld [vmem:[#allocation2 + $0x358] sm:$0xff]
    %v187 = vld [vmem:[#allocation2 + $0x360] sm:$0xff]
    %v188 = vld [vmem:[#allocation2 + $0x368] sm:$0xff]
    %v189 = vld [vmem:[#allocation2 + $0x370] sm:$0xff]
    %v190 = vld [vmem:[#allocation2 + $0x378] sm:$0xff]
    %v191 = vld [vmem:[#allocation2 + $0x380] sm:$0xff]
    %v192 = vld [vmem:[#allocation2 + $0x388] sm:$0xff]
    %v193 = vld [vmem:[#allocation2 + $0x390] sm:$0xff]
    %v194 = vld [vmem:[#allocation2 + $0x398] sm:$0xff]
    %v195 = vld [vmem:[#allocation2 + $0x3a0] sm:$0xff]
    %v196 = vld [vmem:[#allocation2 + $0x3a8] sm:$0xff]
    %v197 = vld [vmem:[#allocation2 + $0x3b0] sm:$0xff]
    %v198 = vld [vmem:[#allocation2 + $0x3b8] sm:$0xff]
    %v199 = vld [vmem:[#allocation2 + $0x3c0] sm:$0xff]
    %v200 = vld [vmem:[#allocation2 + $0x3c8] sm:$0xff]
    %v201 = vld [vmem:[#allocation2 + $0x3d0] sm:$0xff]
    %v202 = vld [vmem:[#allocation2 + $0x3d8] sm:$0xff]
    %v203 = vld [vmem:[#allocation2 + $0x3e0] sm:$0xff]
    %v204 = vld [vmem:[#allocation2 + $0x3e8] sm:$0xff]
    %v205 = vld [vmem:[#allocation2 + $0x3f0] sm:$0xff]
    %v206 = vld [vmem:[#allocation2 + $0x3f8] sm:$0xff]
    %v207 = vld [vmem:[%s2] sm:$0xff]
    %v209 = vperm.slane %v207, 0
    %v210 = vperm.slane %v207, 1
    %v211 = vperm.slane %v207, 2
    %v212 = vperm.slane %v207, 3
    %v213 = vperm.slane %v207, 4
    %v214 = vperm.slane %v207, 5
    %v215 = vperm.slane %v207, 6
    %v216 = vperm.slane %v207, 7
    %v353 = vunpack.c.l.b16 %v79
    %v354 = vunpack.c.h.b16 %v79
    %v355 = vunpack.c.l.b16 %v80
    %v356 = vunpack.c.h.b16 %v80
    %v357 = vunpack.c.l.b16 %v81
    %v358 = vunpack.c.h.b16 %v81
    %v359 = vunpack.c.l.b16 %v82
    %v360 = vunpack.c.h.b16 %v82
    %v361 = vunpack.c.l.b16 %v83
    %v362 = vunpack.c.h.b16 %v83
    %v363 = vunpack.c.l.b16 %v84
    %v364 = vunpack.c.h.b16 %v84
    %v365 = vunpack.c.l.b16 %v85
    %v366 = vunpack.c.h.b16 %v85
    %v367 = vunpack.c.l.b16 %v86
    %v368 = vunpack.c.h.b16 %v86
    %v369 = vunpack.c.l.b16 %v87
    %v370 = vunpack.c.h.b16 %v87
    %v371 = vunpack.c.l.b16 %v88
    %v372 = vunpack.c.h.b16 %v88
    %v373 = vunpack.c.l.b16 %v89
    %v374 = vunpack.c.h.b16 %v89
    %v375 = vunpack.c.l.b16 %v90
    %v376 = vunpack.c.h.b16 %v90
    %v377 = vunpack.c.l.b16 %v91
    %v378 = vunpack.c.h.b16 %v91
    %v379 = vunpack.c.l.b16 %v92
    %v380 = vunpack.c.h.b16 %v92
    %v381 = vunpack.c.l.b16 %v93
    %v382 = vunpack.c.h.b16 %v93
    %v383 = vunpack.c.l.b16 %v94
    %v384 = vunpack.c.h.b16 %v94
    %v385 = vunpack.c.l.b16 %v95
    %v386 = vunpack.c.h.b16 %v95
    %v387 = vunpack.c.l.b16 %v96
    %v388 = vunpack.c.h.b16 %v96
    %v389 = vunpack.c.l.b16 %v97
    %v390 = vunpack.c.h.b16 %v97
    %v391 = vunpack.c.l.b16 %v98
    %v392 = vunpack.c.h.b16 %v98
    %v393 = vunpack.c.l.b16 %v99
    %v394 = vunpack.c.h.b16 %v99
    %v395 = vunpack.c.l.b16 %v100
    %v396 = vunpack.c.h.b16 %v100
    %v397 = vunpack.c.l.b16 %v101
    %v398 = vunpack.c.h.b16 %v101
    %v399 = vunpack.c.l.b16 %v102
    %v400 = vunpack.c.h.b16 %v102
    %v401 = vunpack.c.l.b16 %v103
    %v402 = vunpack.c.h.b16 %v103
    %v403 = vunpack.c.l.b16 %v104
    %v404 = vunpack.c.h.b16 %v104
    %v405 = vunpack.c.l.b16 %v105
    %v406 = vunpack.c.h.b16 %v105
    %v407 = vunpack.c.l.b16 %v106
    %v408 = vunpack.c.h.b16 %v106
    %v409 = vunpack.c.l.b16 %v107
    %v410 = vunpack.c.h.b16 %v107
    %v411 = vunpack.c.l.b16 %v108
    %v412 = vunpack.c.h.b16 %v108
    %v413 = vunpack.c.l.b16 %v109
    %v414 = vunpack.c.h.b16 %v109
    %v415 = vunpack.c.l.b16 %v110
    %v416 = vunpack.c.h.b16 %v110
    %v417 = vunpack.c.l.b16 %v111
    %v418 = vunpack.c.h.b16 %v111
    %v419 = vunpack.c.l.b16 %v112
    %v420 = vunpack.c.h.b16 %v112
    %v421 = vunpack.c.l.b16 %v113
    %v422 = vunpack.c.h.b16 %v113
    %v423 = vunpack.c.l.b16 %v114
    %v424 = vunpack.c.h.b16 %v114
    %v425 = vunpack.c.l.b16 %v115
    %v426 = vunpack.c.h.b16 %v115
    %v427 = vunpack.c.l.b16 %v116
    %v428 = vunpack.c.h.b16 %v116
    %v429 = vunpack.c.l.b16 %v117
    %v430 = vunpack.c.h.b16 %v117
    %v431 = vunpack.c.l.b16 %v118
    %v432 = vunpack.c.h.b16 %v118
    %v433 = vunpack.c.l.b16 %v119
    %v434 = vunpack.c.h.b16 %v119
    %v435 = vunpack.c.l.b16 %v120
    %v436 = vunpack.c.h.b16 %v120
    %v437 = vunpack.c.l.b16 %v121
    %v438 = vunpack.c.h.b16 %v121
    %v439 = vunpack.c.l.b16 %v122
    %v440 = vunpack.c.h.b16 %v122
    %v441 = vunpack.c.l.b16 %v123
    %v442 = vunpack.c.h.b16 %v123
    %v443 = vunpack.c.l.b16 %v124
    %v444 = vunpack.c.h.b16 %v124
    %v445 = vunpack.c.l.b16 %v125
    %v446 = vunpack.c.h.b16 %v125
    %v447 = vunpack.c.l.b16 %v126
    %v448 = vunpack.c.h.b16 %v126
    %v449 = vunpack.c.l.b16 %v127
    %v450 = vunpack.c.h.b16 %v127
    %v451 = vunpack.c.l.b16 %v128
    %v452 = vunpack.c.h.b16 %v128
    %v453 = vunpack.c.l.b16 %v129
    %v454 = vunpack.c.h.b16 %v129
    %v455 = vunpack.c.l.b16 %v130
    %v456 = vunpack.c.h.b16 %v130
    %v457 = vunpack.c.l.b16 %v131
    %v458 = vunpack.c.h.b16 %v131
    %v459 = vunpack.c.l.b16 %v132
    %v460 = vunpack.c.h.b16 %v132
    %v461 = vunpack.c.l.b16 %v133
    %v462 = vunpack.c.h.b16 %v133
    %v463 = vunpack.c.l.b16 %v134
    %v464 = vunpack.c.h.b16 %v134
    %v465 = vunpack.c.l.b16 %v135
    %v466 = vunpack.c.h.b16 %v135
    %v467 = vunpack.c.l.b16 %v136
    %v468 = vunpack.c.h.b16 %v136
    %v469 = vunpack.c.l.b16 %v137
    %v470 = vunpack.c.h.b16 %v137
    %v471 = vunpack.c.l.b16 %v138
    %v472 = vunpack.c.h.b16 %v138
    %v473 = vunpack.c.l.b16 %v139
    %v474 = vunpack.c.h.b16 %v139
    %v475 = vunpack.c.l.b16 %v140
    %v476 = vunpack.c.h.b16 %v140
    %v477 = vunpack.c.l.b16 %v141
    %v478 = vunpack.c.h.b16 %v141
    %v479 = vunpack.c.l.b16 %v142
    %v480 = vunpack.c.h.b16 %v142
    %v481 = vunpack.c.l.b16 %v143
    %v482 = vunpack.c.h.b16 %v143
    %v483 = vunpack.c.l.b16 %v144
    %v484 = vunpack.c.h.b16 %v144
    %v485 = vunpack.c.l.b16 %v145
    %v486 = vunpack.c.h.b16 %v145
    %v487 = vunpack.c.l.b16 %v146
    %v488 = vunpack.c.h.b16 %v146
    %v489 = vunpack.c.l.b16 %v147
    %v490 = vunpack.c.h.b16 %v147
    %v491 = vunpack.c.l.b16 %v148
    %v492 = vunpack.c.h.b16 %v148
    %v493 = vunpack.c.l.b16 %v149
    %v494 = vunpack.c.h.b16 %v149
    %v495 = vunpack.c.l.b16 %v150
    %v496 = vunpack.c.h.b16 %v150
    %v497 = vunpack.c.l.b16 %v151
    %v498 = vunpack.c.h.b16 %v151
    %v499 = vunpack.c.l.b16 %v152
    %v500 = vunpack.c.h.b16 %v152
    %v501 = vunpack.c.l.b16 %v153
    %v502 = vunpack.c.h.b16 %v153
    %v503 = vunpack.c.l.b16 %v154
    %v504 = vunpack.c.h.b16 %v154
    %v505 = vunpack.c.l.b16 %v155
    %v506 = vunpack.c.h.b16 %v155
    %v507 = vunpack.c.l.b16 %v156
    %v508 = vunpack.c.h.b16 %v156
    %v509 = vunpack.c.l.b16 %v157
    %v510 = vunpack.c.h.b16 %v157
    %v511 = vunpack.c.l.b16 %v158
    %v512 = vunpack.c.h.b16 %v158
    %v513 = vunpack.c.l.b16 %v159
    %v514 = vunpack.c.h.b16 %v159
    %v515 = vunpack.c.l.b16 %v160
    %v516 = vunpack.c.h.b16 %v160
    %v517 = vunpack.c.l.b16 %v161
    %v518 = vunpack.c.h.b16 %v161
    %v519 = vunpack.c.l.b16 %v162
    %v520 = vunpack.c.h.b16 %v162
    %v521 = vunpack.c.l.b16 %v163
    %v522 = vunpack.c.h.b16 %v163
    %v523 = vunpack.c.l.b16 %v164
    %v524 = vunpack.c.h.b16 %v164
    %v525 = vunpack.c.l.b16 %v165
    %v526 = vunpack.c.h.b16 %v165
    %v527 = vunpack.c.l.b16 %v166
    %v528 = vunpack.c.h.b16 %v166
    %v529 = vunpack.c.l.b16 %v167
    %v530 = vunpack.c.h.b16 %v167
    %v531 = vunpack.c.l.b16 %v168
    %v532 = vunpack.c.h.b16 %v168
    %v533 = vunpack.c.l.b16 %v169
    %v534 = vunpack.c.h.b16 %v169
    %v535 = vunpack.c.l.b16 %v170
    %v536 = vunpack.c.h.b16 %v170
    %v537 = vunpack.c.l.b16 %v171
    %v538 = vunpack.c.h.b16 %v171
    %v539 = vunpack.c.l.b16 %v172
    %v540 = vunpack.c.h.b16 %v172
    %v541 = vunpack.c.l.b16 %v173
    %v542 = vunpack.c.h.b16 %v173
    %v543 = vunpack.c.l.b16 %v174
    %v544 = vunpack.c.h.b16 %v174
    %v545 = vunpack.c.l.b16 %v175
    %v546 = vunpack.c.h.b16 %v175
    %v547 = vunpack.c.l.b16 %v176
    %v548 = vunpack.c.h.b16 %v176
    %v549 = vunpack.c.l.b16 %v177
    %v550 = vunpack.c.h.b16 %v177
    %v551 = vunpack.c.l.b16 %v178
    %v552 = vunpack.c.h.b16 %v178
    %v553 = vunpack.c.l.b16 %v179
    %v554 = vunpack.c.h.b16 %v179
    %v555 = vunpack.c.l.b16 %v180
    %v556 = vunpack.c.h.b16 %v180
    %v557 = vunpack.c.l.b16 %v181
    %v558 = vunpack.c.h.b16 %v181
    %v559 = vunpack.c.l.b16 %v182
    %v560 = vunpack.c.h.b16 %v182
    %v561 = vunpack.c.l.b16 %v183
    %v562 = vunpack.c.h.b16 %v183
    %v563 = vunpack.c.l.b16 %v184
    %v564 = vunpack.c.h.b16 %v184
    %v565 = vunpack.c.l.b16 %v185
    %v566 = vunpack.c.h.b16 %v185
    %v567 = vunpack.c.l.b16 %v186
    %v568 = vunpack.c.h.b16 %v186
    %v569 = vunpack.c.l.b16 %v187
    %v570 = vunpack.c.h.b16 %v187
    %v571 = vunpack.c.l.b16 %v188
    %v572 = vunpack.c.h.b16 %v188
    %v573 = vunpack.c.l.b16 %v189
    %v574 = vunpack.c.h.b16 %v189
    %v575 = vunpack.c.l.b16 %v190
    %v576 = vunpack.c.h.b16 %v190
    %v577 = vunpack.c.l.b16 %v191
    %v578 = vunpack.c.h.b16 %v191
    %v579 = vunpack.c.l.b16 %v192
    %v580 = vunpack.c.h.b16 %v192
    %v581 = vunpack.c.l.b16 %v193
    %v582 = vunpack.c.h.b16 %v193
    %v583 = vunpack.c.l.b16 %v194
    %v584 = vunpack.c.h.b16 %v194
    %v585 = vunpack.c.l.b16 %v195
    %v586 = vunpack.c.h.b16 %v195
    %v587 = vunpack.c.l.b16 %v196
    %v588 = vunpack.c.h.b16 %v196
    %v589 = vunpack.c.l.b16 %v197
    %v590 = vunpack.c.h.b16 %v197
    %v591 = vunpack.c.l.b16 %v198
    %v592 = vunpack.c.h.b16 %v198
    %v593 = vunpack.c.l.b16 %v199
    %v594 = vunpack.c.h.b16 %v199
    %v595 = vunpack.c.l.b16 %v200
    %v596 = vunpack.c.h.b16 %v200
    %v597 = vunpack.c.l.b16 %v201
    %v598 = vunpack.c.h.b16 %v201
    %v599 = vunpack.c.l.b16 %v202
    %v600 = vunpack.c.h.b16 %v202
    %v601 = vunpack.c.l.b16 %v203
    %v602 = vunpack.c.h.b16 %v203
    %v603 = vunpack.c.l.b16 %v204
    %v604 = vunpack.c.h.b16 %v204
    %v605 = vunpack.c.l.b16 %v205
    %v606 = vunpack.c.h.b16 %v205
    %v607 = vunpack.c.l.b16 %v206
    %v608 = vunpack.c.h.b16 %v206
    %v609 = vpack.c.b16 %v361, %v353
    %v610 = vpack.c.b16 %v362, %v354
    %v611 = vpack.c.b16 %v363, %v355
    %v612 = vpack.c.b16 %v364, %v356
    %v613 = vpack.c.b16 %v365, %v357
    %v614 = vpack.c.b16 %v366, %v358
    %v615 = vpack.c.b16 %v367, %v359
    %v616 = vpack.c.b16 %v368, %v360
    %v617 = vpack.c.b16 %v377, %v369
    %v618 = vpack.c.b16 %v378, %v370
    %v619 = vpack.c.b16 %v379, %v371
    %v620 = vpack.c.b16 %v380, %v372
    %v621 = vpack.c.b16 %v381, %v373
    %v622 = vpack.c.b16 %v382, %v374
    %v623 = vpack.c.b16 %v383, %v375
    %v624 = vpack.c.b16 %v384, %v376
    %v625 = vpack.c.b16 %v393, %v385
    %v626 = vpack.c.b16 %v394, %v386
    %v627 = vpack.c.b16 %v395, %v387
    %v628 = vpack.c.b16 %v396, %v388
    %v629 = vpack.c.b16 %v397, %v389
    %v630 = vpack.c.b16 %v398, %v390
    %v631 = vpack.c.b16 %v399, %v391
    %v632 = vpack.c.b16 %v400, %v392
    %v633 = vpack.c.b16 %v409, %v401
    %v634 = vpack.c.b16 %v410, %v402
    %v635 = vpack.c.b16 %v411, %v403
    %v636 = vpack.c.b16 %v412, %v404
    %v637 = vpack.c.b16 %v413, %v405
    %v638 = vpack.c.b16 %v414, %v406
    %v639 = vpack.c.b16 %v415, %v407
    %v640 = vpack.c.b16 %v416, %v408
    %v641 = vpack.c.b16 %v425, %v417
    %v642 = vpack.c.b16 %v426, %v418
    %v643 = vpack.c.b16 %v427, %v419
    %v644 = vpack.c.b16 %v428, %v420
    %v645 = vpack.c.b16 %v429, %v421
    %v646 = vpack.c.b16 %v430, %v422
    %v647 = vpack.c.b16 %v431, %v423
    %v648 = vpack.c.b16 %v432, %v424
    %v649 = vpack.c.b16 %v441, %v433
    %v650 = vpack.c.b16 %v442, %v434
    %v651 = vpack.c.b16 %v443, %v435
    %v652 = vpack.c.b16 %v444, %v436
    %v653 = vpack.c.b16 %v445, %v437
    %v654 = vpack.c.b16 %v446, %v438
    %v655 = vpack.c.b16 %v447, %v439
    %v656 = vpack.c.b16 %v448, %v440
    %v657 = vpack.c.b16 %v457, %v449
    %v658 = vpack.c.b16 %v458, %v450
    %v659 = vpack.c.b16 %v459, %v451
    %v660 = vpack.c.b16 %v460, %v452
    %v661 = vpack.c.b16 %v461, %v453
    %v662 = vpack.c.b16 %v462, %v454
    %v663 = vpack.c.b16 %v463, %v455
    %v664 = vpack.c.b16 %v464, %v456
    %v665 = vpack.c.b16 %v473, %v465
    %v666 = vpack.c.b16 %v474, %v466
    %v667 = vpack.c.b16 %v475, %v467
    %v668 = vpack.c.b16 %v476, %v468
    %v669 = vpack.c.b16 %v477, %v469
    %v670 = vpack.c.b16 %v478, %v470
    %v671 = vpack.c.b16 %v479, %v471
    %v672 = vpack.c.b16 %v480, %v472
    %v673 = vpack.c.b16 %v489, %v481
    %v674 = vpack.c.b16 %v490, %v482
    %v675 = vpack.c.b16 %v491, %v483
    %v676 = vpack.c.b16 %v492, %v484
    %v677 = vpack.c.b16 %v493, %v485
    %v678 = vpack.c.b16 %v494, %v486
    %v679 = vpack.c.b16 %v495, %v487
    %v680 = vpack.c.b16 %v496, %v488
    %v681 = vpack.c.b16 %v505, %v497
    %v682 = vpack.c.b16 %v506, %v498
    %v683 = vpack.c.b16 %v507, %v499
    %v684 = vpack.c.b16 %v508, %v500
    %v685 = vpack.c.b16 %v509, %v501
    %v686 = vpack.c.b16 %v510, %v502
    %v687 = vpack.c.b16 %v511, %v503
    %v688 = vpack.c.b16 %v512, %v504
    %v689 = vpack.c.b16 %v521, %v513
    %v690 = vpack.c.b16 %v522, %v514
    %v691 = vpack.c.b16 %v523, %v515
    %v692 = vpack.c.b16 %v524, %v516
    %v693 = vpack.c.b16 %v525, %v517
    %v694 = vpack.c.b16 %v526, %v518
    %v695 = vpack.c.b16 %v527, %v519
    %v696 = vpack.c.b16 %v528, %v520
    %v697 = vpack.c.b16 %v537, %v529
    %v698 = vpack.c.b16 %v538, %v530
    %v699 = vpack.c.b16 %v539, %v531
    %v700 = vpack.c.b16 %v540, %v532
    %v701 = vpack.c.b16 %v541, %v533
    %v702 = vpack.c.b16 %v542, %v534
    %v703 = vpack.c.b16 %v543, %v535
    %v704 = vpack.c.b16 %v544, %v536
    %v705 = vpack.c.b16 %v553, %v545
    %v706 = vpack.c.b16 %v554, %v546
    %v707 = vpack.c.b16 %v555, %v547
    %v708 = vpack.c.b16 %v556, %v548
    %v709 = vpack.c.b16 %v557, %v549
    %v710 = vpack.c.b16 %v558, %v550
    %v711 = vpack.c.b16 %v559, %v551
    %v712 = vpack.c.b16 %v560, %v552
    %v713 = vpack.c.b16 %v569, %v561
    %v714 = vpack.c.b16 %v570, %v562
    %v715 = vpack.c.b16 %v571, %v563
    %v716 = vpack.c.b16 %v572, %v564
    %v717 = vpack.c.b16 %v573, %v565
    %v718 = vpack.c.b16 %v574, %v566
    %v719 = vpack.c.b16 %v575, %v567
    %v720 = vpack.c.b16 %v576, %v568
    %v721 = vpack.c.b16 %v585, %v577
    %v722 = vpack.c.b16 %v586, %v578
    %v723 = vpack.c.b16 %v587, %v579
    %v724 = vpack.c.b16 %v588, %v580
    %v725 = vpack.c.b16 %v589, %v581
    %v726 = vpack.c.b16 %v590, %v582
    %v727 = vpack.c.b16 %v591, %v583
    %v728 = vpack.c.b16 %v592, %v584
    %v729 = vpack.c.b16 %v601, %v593
    %v730 = vpack.c.b16 %v602, %v594
    %v731 = vpack.c.b16 %v603, %v595
    %v732 = vpack.c.b16 %v604, %v596
    %v733 = vpack.c.b16 %v605, %v597
    %v734 = vpack.c.b16 %v606, %v598
    %v735 = vpack.c.b16 %v607, %v599
    %v736 = vpack.c.b16 %v608, %v600
    %865 = vmatpush.bf16.msra.mxu0 %v665
    %866 = vmatpush.bf16.msra.mxu0 %v657
    %867 = vmatpush.bf16.msra.mxu0 %v649
    %868 = vmatpush.bf16.msra.mxu0 %v641
    %869 = vmatpush.bf16.msra.mxu0 %v633
    %870 = vmatpush.bf16.msra.mxu0 %v625
    %871 = vmatpush.bf16.msra.mxu0 %v617
    %872 = vmatpush.bf16.msra.mxu0 %v609
    %873 = vmatmul.bf16.gmra.mxu0 %v77
    %v874 = vpop.f32.mrf.mxu0
    %v875 = vadd.f32 %v209, %v874
    %v876 = vpop.f32.mrf.mxu0
    %v877 = vadd.f32 %v209, %v876
    %878 = vdwg.mxu0
    %879 = vmatpush.bf16.msra.mxu0 %v729
    %880 = vmatpush.bf16.msra.mxu0 %v721
    %881 = vmatpush.bf16.msra.mxu0 %v713
    %882 = vmatpush.bf16.msra.mxu0 %v705
    %883 = vmatpush.bf16.msra.mxu0 %v697
    %884 = vmatpush.bf16.msra.mxu0 %v689
    %885 = vmatpush.bf16.msra.mxu0 %v681
    %886 = vmatpush.bf16.msra.mxu0 %v673
    %887 = vmatmul.bf16.gmra.mxu0 %v78
    %v888 = vpop.f32.mrf.mxu0
    %v889 = vadd.f32 %v875, %v888
    %v890 = vpop.f32.mrf.mxu0
    %v891 = vadd.f32 %v877, %v890
    %892 = vdwg.mxu0
    %893 = vmatpush.bf16.msra.mxu0 %v666
    %894 = vmatpush.bf16.msra.mxu0 %v658
    %895 = vmatpush.bf16.msra.mxu0 %v650
    %896 = vmatpush.bf16.msra.mxu0 %v642
    %897 = vmatpush.bf16.msra.mxu0 %v634
    %898 = vmatpush.bf16.msra.mxu0 %v626
    %899 = vmatpush.bf16.msra.mxu0 %v618
    %900 = vmatpush.bf16.msra.mxu0 %v610
    %901 = vmatmul.bf16.gmra.mxu0 %v77
    %v902 = vpop.f32.mrf.mxu0
    %v903 = vadd.f32 %v210, %v902
    %v904 = vpop.f32.mrf.mxu0
    %v905 = vadd.f32 %v210, %v904
    %906 = vdwg.mxu0
    %907 = vmatpush.bf16.msra.mxu0 %v730
    %908 = vmatpush.bf16.msra.mxu0 %v722
    %909 = vmatpush.bf16.msra.mxu0 %v714
    %910 = vmatpush.bf16.msra.mxu0 %v706
    %911 = vmatpush.bf16.msra.mxu0 %v698
    %912 = vmatpush.bf16.msra.mxu0 %v690
    %913 = vmatpush.bf16.msra.mxu0 %v682
    %914 = vmatpush.bf16.msra.mxu0 %v674
    %915 = vmatmul.bf16.gmra.mxu0 %v78
    %v916 = vpop.f32.mrf.mxu0
    %v917 = vadd.f32 %v903, %v916
    %v918 = vpop.f32.mrf.mxu0
    %v919 = vadd.f32 %v905, %v918
    %920 = vdwg.mxu0
    %921 = vmatpush.bf16.msra.mxu0 %v667
    %922 = vmatpush.bf16.msra.mxu0 %v659
    %923 = vmatpush.bf16.msra.mxu0 %v651
    %924 = vmatpush.bf16.msra.mxu0 %v643
    %925 = vmatpush.bf16.msra.mxu0 %v635
    %926 = vmatpush.bf16.msra.mxu0 %v627
    %927 = vmatpush.bf16.msra.mxu0 %v619
    %928 = vmatpush.bf16.msra.mxu0 %v611
    %929 = vmatmul.bf16.gmra.mxu0 %v77
    %v930 = vpop.f32.mrf.mxu0
    %v931 = vadd.f32 %v211, %v930
    %v932 = vpop.f32.mrf.mxu0
    %v933 = vadd.f32 %v211, %v932
    %934 = vdwg.mxu0
    %935 = vmatpush.bf16.msra.mxu0 %v731
    %936 = vmatpush.bf16.msra.mxu0 %v723
    %937 = vmatpush.bf16.msra.mxu0 %v715
    %938 = vmatpush.bf16.msra.mxu0 %v707
    %939 = vmatpush.bf16.msra.mxu0 %v699
    %940 = vmatpush.bf16.msra.mxu0 %v691
    %941 = vmatpush.bf16.msra.mxu0 %v683
    %942 = vmatpush.bf16.msra.mxu0 %v675
    %943 = vmatmul.bf16.gmra.mxu0 %v78
    %v944 = vpop.f32.mrf.mxu0
    %v945 = vadd.f32 %v931, %v944
    %v946 = vpop.f32.mrf.mxu0
    %v947 = vadd.f32 %v933, %v946
    %948 = vdwg.mxu0
    %949 = vmatpush.bf16.msra.mxu0 %v668
    %950 = vmatpush.bf16.msra.mxu0 %v660
    %951 = vmatpush.bf16.msra.mxu0 %v652
    %952 = vmatpush.bf16.msra.mxu0 %v644
    %953 = vmatpush.bf16.msra.mxu0 %v636
    %954 = vmatpush.bf16.msra.mxu0 %v628
    %955 = vmatpush.bf16.msra.mxu0 %v620
    %956 = vmatpush.bf16.msra.mxu0 %v612
    %957 = vmatmul.bf16.gmra.mxu0 %v77
    %v958 = vpop.f32.mrf.mxu0
    %v959 = vadd.f32 %v212, %v958
    %v960 = vpop.f32.mrf.mxu0
    %v961 = vadd.f32 %v212, %v960
    %962 = vdwg.mxu0
    %963 = vmatpush.bf16.msra.mxu0 %v732
    %964 = vmatpush.bf16.msra.mxu0 %v724
    %965 = vmatpush.bf16.msra.mxu0 %v716
    %966 = vmatpush.bf16.msra.mxu0 %v708
    %967 = vmatpush.bf16.msra.mxu0 %v700
    %968 = vmatpush.bf16.msra.mxu0 %v692
    %969 = vmatpush.bf16.msra.mxu0 %v684
    %970 = vmatpush.bf16.msra.mxu0 %v676
    %971 = vmatmul.bf16.gmra.mxu0 %v78
    %v972 = vpop.f32.mrf.mxu0
    %v973 = vadd.f32 %v959, %v972
    %v974 = vpop.f32.mrf.mxu0
    %v975 = vadd.f32 %v961, %v974
    %976 = vdwg.mxu0
    %977 = vmatpush.bf16.msra.mxu0 %v669
    %978 = vmatpush.bf16.msra.mxu0 %v661
    %979 = vmatpush.bf16.msra.mxu0 %v653
    %980 = vmatpush.bf16.msra.mxu0 %v645
    %981 = vmatpush.bf16.msra.mxu0 %v637
    %982 = vmatpush.bf16.msra.mxu0 %v629
    %983 = vmatpush.bf16.msra.mxu0 %v621
    %984 = vmatpush.bf16.msra.mxu0 %v613
    %985 = vmatmul.bf16.gmra.mxu0 %v77
    %v986 = vpop.f32.mrf.mxu0
    %v987 = vadd.f32 %v213, %v986
    %v988 = vpop.f32.mrf.mxu0
    %v989 = vadd.f32 %v213, %v988
    %990 = vdwg.mxu0
    %991 = vmatpush.bf16.msra.mxu0 %v733
    %992 = vmatpush.bf16.msra.mxu0 %v725
    %993 = vmatpush.bf16.msra.mxu0 %v717
    %994 = vmatpush.bf16.msra.mxu0 %v709
    %995 = vmatpush.bf16.msra.mxu0 %v701
    %996 = vmatpush.bf16.msra.mxu0 %v693
    %997 = vmatpush.bf16.msra.mxu0 %v685
    %998 = vmatpush.bf16.msra.mxu0 %v677
    %999 = vmatmul.bf16.gmra.mxu0 %v78
    %v1000 = vpop.f32.mrf.mxu0
    %v1001 = vadd.f32 %v987, %v1000
    %v1002 = vpop.f32.mrf.mxu0
    %v1003 = vadd.f32 %v989, %v1002
    %1004 = vdwg.mxu0
    %1005 = vmatpush.bf16.msra.mxu0 %v670
    %1006 = vmatpush.bf16.msra.mxu0 %v662
    %1007 = vmatpush.bf16.msra.mxu0 %v654
    %1008 = vmatpush.bf16.msra.mxu0 %v646
    %1009 = vmatpush.bf16.msra.mxu0 %v638
    %1010 = vmatpush.bf16.msra.mxu0 %v630
    %1011 = vmatpush.bf16.msra.mxu0 %v622
    %1012 = vmatpush.bf16.msra.mxu0 %v614
    %1013 = vmatmul.bf16.gmra.mxu0 %v77
    %v1014 = vpop.f32.mrf.mxu0
    %v1015 = vadd.f32 %v214, %v1014
    %v1016 = vpop.f32.mrf.mxu0
    %v1017 = vadd.f32 %v214, %v1016
    %1018 = vdwg.mxu0
    %1019 = vmatpush.bf16.msra.mxu0 %v734
    %1020 = vmatpush.bf16.msra.mxu0 %v726
    %1021 = vmatpush.bf16.msra.mxu0 %v718
    %1022 = vmatpush.bf16.msra.mxu0 %v710
    %1023 = vmatpush.bf16.msra.mxu0 %v702
    %1024 = vmatpush.bf16.msra.mxu0 %v694
    %1025 = vmatpush.bf16.msra.mxu0 %v686
    %1026 = vmatpush.bf16.msra.mxu0 %v678
    %1027 = vmatmul.bf16.gmra.mxu0 %v78
    %v1028 = vpop.f32.mrf.mxu0
    %v1029 = vadd.f32 %v1015, %v1028
    %v1030 = vpop.f32.mrf.mxu0
    %v1031 = vadd.f32 %v1017, %v1030
    %1032 = vdwg.mxu0
    %1033 = vmatpush.bf16.msra.mxu0 %v671
    %1034 = vmatpush.bf16.msra.mxu0 %v663
    %1035 = vmatpush.bf16.msra.mxu0 %v655
    %1036 = vmatpush.bf16.msra.mxu0 %v647
    %1037 = vmatpush.bf16.msra.mxu0 %v639
    %1038 = vmatpush.bf16.msra.mxu0 %v631
    %1039 = vmatpush.bf16.msra.mxu0 %v623
    %1040 = vmatpush.bf16.msra.mxu0 %v615
    %1041 = vmatmul.bf16.gmra.mxu0 %v77
    %v1042 = vpop.f32.mrf.mxu0
    %v1043 = vadd.f32 %v215, %v1042
    %v1044 = vpop.f32.mrf.mxu0
    %v1045 = vadd.f32 %v215, %v1044
    %1046 = vdwg.mxu0
    %1047 = vmatpush.bf16.msra.mxu0 %v735
    %1048 = vmatpush.bf16.msra.mxu0 %v727
    %1049 = vmatpush.bf16.msra.mxu0 %v719
    %1050 = vmatpush.bf16.msra.mxu0 %v711
    %1051 = vmatpush.bf16.msra.mxu0 %v703
    %1052 = vmatpush.bf16.msra.mxu0 %v695
    %1053 = vmatpush.bf16.msra.mxu0 %v687
    %1054 = vmatpush.bf16.msra.mxu0 %v679
    %1055 = vmatmul.bf16.gmra.mxu0 %v78
    %v1056 = vpop.f32.mrf.mxu0
    %v1057 = vadd.f32 %v1043, %v1056
    %v1058 = vpop.f32.mrf.mxu0
    %v1059 = vadd.f32 %v1045, %v1058
    %1060 = vdwg.mxu0
    %1061 = vmatpush.bf16.msra.mxu0 %v672
    %1062 = vmatpush.bf16.msra.mxu0 %v664
    %1063 = vmatpush.bf16.msra.mxu0 %v656
    %1064 = vmatpush.bf16.msra.mxu0 %v648
    %1065 = vmatpush.bf16.msra.mxu0 %v640
    %1066 = vmatpush.bf16.msra.mxu0 %v632
    %1067 = vmatpush.bf16.msra.mxu0 %v624
    %1068 = vmatpush.bf16.msra.mxu0 %v616
    %1069 = vmatmul.bf16.gmra.mxu0 %v77
    %v1070 = vpop.f32.mrf.mxu0
    %v1071 = vadd.f32 %v216, %v1070
    %v1072 = vpop.f32.mrf.mxu0
    %v1073 = vadd.f32 %v216, %v1072
    %1074 = vdwg.mxu0
    %1075 = vmatpush.bf16.msra.mxu0 %v736
    %1076 = vmatpush.bf16.msra.mxu0 %v728
    %1077 = vmatpush.bf16.msra.mxu0 %v720
    %1078 = vmatpush.bf16.msra.mxu0 %v712
    %1079 = vmatpush.bf16.msra.mxu0 %v704
    %1080 = vmatpush.bf16.msra.mxu0 %v696
    %1081 = vmatpush.bf16.msra.mxu0 %v688
    %1082 = vmatpush.bf16.msra.mxu0 %v680
    %1083 = vmatmul.bf16.gmra.mxu0 %v78
    %v1084 = vpop.f32.mrf.mxu0
    %v1085 = vadd.f32 %v1071, %v1084
    %v1086 = vpop.f32.mrf.mxu0
    %v1087 = vadd.f32 %v1073, %v1086
    %1088 = vdwg.mxu0
    %v1089 = vmax.f32 %v889, 0.0
    %v1090 = vmax.f32 %v917, 0.0
    %v1091 = vmax.f32 %v945, 0.0
    %v1092 = vmax.f32 %v973, 0.0
    %v1093 = vmax.f32 %v1001, 0.0
    %v1094 = vmax.f32 %v1029, 0.0
    %v1095 = vmax.f32 %v1057, 0.0
    %v1096 = vmax.f32 %v1085, 0.0
    %v1097 = vmax.f32 %v891, 0.0
    %v1098 = vmax.f32 %v919, 0.0
    %v1099 = vmax.f32 %v947, 0.0
    %v1100 = vmax.f32 %v975, 0.0
    %v1101 = vmax.f32 %v1003, 0.0
    %v1102 = vmax.f32 %v1031, 0.0
    %v1103 = vmax.f32 %v1059, 0.0
    %v1104 = vmax.f32 %v1087, 0.0
    %v1105 = vpack.c.bf16 %v1097, %v1089
    %v1106 = vpack.c.bf16 %v1098, %v1090
    %v1107 = vpack.c.bf16 %v1099, %v1091
    %v1108 = vpack.c.bf16 %v1100, %v1092
    %v1109 = vpack.c.bf16 %v1101, %v1093
    %v1110 = vpack.c.bf16 %v1102, %v1094
    %v1111 = vpack.c.bf16 %v1103, %v1095
    %v1112 = vpack.c.bf16 %v1104, %v1096
    %v1113 = vld [vmem:[#allocation4] sm:$0xff]
    %v1114 = vld [vmem:[#allocation4 + $0x8] sm:$0xff]
    %v1115 = vld [vmem:[#allocation4 + $0x10] sm:$0xff]
    %v1116 = vld [vmem:[#allocation4 + $0x18] sm:$0xff]
    %v1117 = vld [vmem:[#allocation4 + $0x20] sm:$0xff]
    %v1118 = vld [vmem:[#allocation4 + $0x28] sm:$0xff]
    %v1119 = vld [vmem:[#allocation4 + $0x30] sm:$0xff]
    %v1120 = vld [vmem:[#allocation4 + $0x38] sm:$0xff]
    %v1121 = vld [vmem:[#allocation4 + $0x40] sm:$0xff]
    %v1122 = vld [vmem:[#allocation4 + $0x48] sm:$0xff]
    %v1123 = vld [vmem:[#allocation4 + $0x50] sm:$0xff]
    %v1124 = vld [vmem:[#allocation4 + $0x58] sm:$0xff]
    %v1125 = vld [vmem:[#allocation4 + $0x60] sm:$0xff]
    %v1126 = vld [vmem:[#allocation4 + $0x68] sm:$0xff]
    %v1127 = vld [vmem:[#allocation4 + $0x70] sm:$0xff]
    %v1128 = vld [vmem:[#allocation4 + $0x78] sm:$0xff]
    %v1129 = vld [vmem:[#allocation4 + $0x80] sm:$0xff]
    %v1130 = vld [vmem:[#allocation4 + $0x88] sm:$0xff]
    %v1131 = vld [vmem:[#allocation4 + $0x90] sm:$0xff]
    %v1132 = vld [vmem:[#allocation4 + $0x98] sm:$0xff]
    %v1133 = vld [vmem:[#allocation4 + $0xa0] sm:$0xff]
    %v1134 = vld [vmem:[#allocation4 + $0xa8] sm:$0xff]
    %v1135 = vld [vmem:[#allocation4 + $0xb0] sm:$0xff]
    %v1136 = vld [vmem:[#allocation4 + $0xb8] sm:$0xff]
    %v1137 = vld [vmem:[#allocation4 + $0xc0] sm:$0xff]
    %v1138 = vld [vmem:[#allocation4 + $0xc8] sm:$0xff]
    %v1139 = vld [vmem:[#allocation4 + $0xd0] sm:$0xff]
    %v1140 = vld [vmem:[#allocation4 + $0xd8] sm:$0xff]
    %v1141 = vld [vmem:[#allocation4 + $0xe0] sm:$0xff]
    %v1142 = vld [vmem:[#allocation4 + $0xe8] sm:$0xff]
    %v1143 = vld [vmem:[#allocation4 + $0xf0] sm:$0xff]
    %v1144 = vld [vmem:[#allocation4 + $0xf8] sm:$0xff]
    %v1145 = vld [vmem:[#allocation4 + $0x100] sm:$0xff]
    %v1146 = vld [vmem:[#allocation4 + $0x108] sm:$0xff]
    %v1147 = vld [vmem:[#allocation4 + $0x110] sm:$0xff]
    %v1148 = vld [vmem:[#allocation4 + $0x118] sm:$0xff]
    %v1149 = vld [vmem:[#allocation4 + $0x120] sm:$0xff]
    %v1150 = vld [vmem:[#allocation4 + $0x128] sm:$0xff]
    %v1151 = vld [vmem:[#allocation4 + $0x130] sm:$0xff]
    %v1152 = vld [vmem:[#allocation4 + $0x138] sm:$0xff]
    %v1153 = vld [vmem:[#allocation4 + $0x140] sm:$0xff]
    %v1154 = vld [vmem:[#allocation4 + $0x148] sm:$0xff]
    %v1155 = vld [vmem:[#allocation4 + $0x150] sm:$0xff]
    %v1156 = vld [vmem:[#allocation4 + $0x158] sm:$0xff]
    %v1157 = vld [vmem:[#allocation4 + $0x160] sm:$0xff]
    %v1158 = vld [vmem:[#allocation4 + $0x168] sm:$0xff]
    %v1159 = vld [vmem:[#allocation4 + $0x170] sm:$0xff]
    %v1160 = vld [vmem:[#allocation4 + $0x178] sm:$0xff]
    %v1161 = vld [vmem:[#allocation4 + $0x180] sm:$0xff]
    %v1162 = vld [vmem:[#allocation4 + $0x188] sm:$0xff]
    %v1163 = vld [vmem:[#allocation4 + $0x190] sm:$0xff]
    %v1164 = vld [vmem:[#allocation4 + $0x198] sm:$0xff]
    %v1165 = vld [vmem:[#allocation4 + $0x1a0] sm:$0xff]
    %v1166 = vld [vmem:[#allocation4 + $0x1a8] sm:$0xff]
    %v1167 = vld [vmem:[#allocation4 + $0x1b0] sm:$0xff]
    %v1168 = vld [vmem:[#allocation4 + $0x1b8] sm:$0xff]
    %v1169 = vld [vmem:[#allocation4 + $0x1c0] sm:$0xff]
    %v1170 = vld [vmem:[#allocation4 + $0x1c8] sm:$0xff]
    %v1171 = vld [vmem:[#allocation4 + $0x1d0] sm:$0xff]
    %v1172 = vld [vmem:[#allocation4 + $0x1d8] sm:$0xff]
    %v1173 = vld [vmem:[#allocation4 + $0x1e0] sm:$0xff]
    %v1174 = vld [vmem:[#allocation4 + $0x1e8] sm:$0xff]
    %v1175 = vld [vmem:[#allocation4 + $0x1f0] sm:$0xff]
    %v1176 = vld [vmem:[#allocation4 + $0x1f8] sm:$0xff]
    %v1177 = vld [vmem:[#allocation4 + $0x200] sm:$0xff]
    %v1178 = vld [vmem:[#allocation4 + $0x208] sm:$0xff]
    %v1179 = vld [vmem:[#allocation4 + $0x210] sm:$0xff]
    %v1180 = vld [vmem:[#allocation4 + $0x218] sm:$0xff]
    %v1181 = vld [vmem:[#allocation4 + $0x220] sm:$0xff]
    %v1182 = vld [vmem:[#allocation4 + $0x228] sm:$0xff]
    %v1183 = vld [vmem:[#allocation4 + $0x230] sm:$0xff]
    %v1184 = vld [vmem:[#allocation4 + $0x238] sm:$0xff]
    %v1185 = vld [vmem:[#allocation4 + $0x240] sm:$0xff]
    %v1186 = vld [vmem:[#allocation4 + $0x248] sm:$0xff]
    %v1187 = vld [vmem:[#allocation4 + $0x250] sm:$0xff]
    %v1188 = vld [vmem:[#allocation4 + $0x258] sm:$0xff]
    %v1189 = vld [vmem:[#allocation4 + $0x260] sm:$0xff]
    %v1190 = vld [vmem:[#allocation4 + $0x268] sm:$0xff]
    %v1191 = vld [vmem:[#allocation4 + $0x270] sm:$0xff]
    %v1192 = vld [vmem:[#allocation4 + $0x278] sm:$0xff]
    %v1193 = vld [vmem:[#allocation4 + $0x280] sm:$0xff]
    %v1194 = vld [vmem:[#allocation4 + $0x288] sm:$0xff]
    %v1195 = vld [vmem:[#allocation4 + $0x290] sm:$0xff]
    %v1196 = vld [vmem:[#allocation4 + $0x298] sm:$0xff]
    %v1197 = vld [vmem:[#allocation4 + $0x2a0] sm:$0xff]
    %v1198 = vld [vmem:[#allocation4 + $0x2a8] sm:$0xff]
    %v1199 = vld [vmem:[#allocation4 + $0x2b0] sm:$0xff]
    %v1200 = vld [vmem:[#allocation4 + $0x2b8] sm:$0xff]
    %v1201 = vld [vmem:[#allocation4 + $0x2c0] sm:$0xff]
    %v1202 = vld [vmem:[#allocation4 + $0x2c8] sm:$0xff]
    %v1203 = vld [vmem:[#allocation4 + $0x2d0] sm:$0xff]
    %v1204 = vld [vmem:[#allocation4 + $0x2d8] sm:$0xff]
    %v1205 = vld [vmem:[#allocation4 + $0x2e0] sm:$0xff]
    %v1206 = vld [vmem:[#allocation4 + $0x2e8] sm:$0xff]
    %v1207 = vld [vmem:[#allocation4 + $0x2f0] sm:$0xff]
    %v1208 = vld [vmem:[#allocation4 + $0x2f8] sm:$0xff]
    %v1209 = vld [vmem:[#allocation4 + $0x300] sm:$0xff]
    %v1210 = vld [vmem:[#allocation4 + $0x308] sm:$0xff]
    %v1211 = vld [vmem:[#allocation4 + $0x310] sm:$0xff]
    %v1212 = vld [vmem:[#allocation4 + $0x318] sm:$0xff]
    %v1213 = vld [vmem:[#allocation4 + $0x320] sm:$0xff]
    %v1214 = vld [vmem:[#allocation4 + $0x328] sm:$0xff]
    %v1215 = vld [vmem:[#allocation4 + $0x330] sm:$0xff]
    %v1216 = vld [vmem:[#allocation4 + $0x338] sm:$0xff]
    %v1217 = vld [vmem:[#allocation4 + $0x340] sm:$0xff]
    %v1218 = vld [vmem:[#allocation4 + $0x348] sm:$0xff]
    %v1219 = vld [vmem:[#allocation4 + $0x350] sm:$0xff]
    %v1220 = vld [vmem:[#allocation4 + $0x358] sm:$0xff]
    %v1221 = vld [vmem:[#allocation4 + $0x360] sm:$0xff]
    %v1222 = vld [vmem:[#allocation4 + $0x368] sm:$0xff]
    %v1223 = vld [vmem:[#allocation4 + $0x370] sm:$0xff]
    %v1224 = vld [vmem:[#allocation4 + $0x378] sm:$0xff]
    %v1225 = vld [vmem:[#allocation4 + $0x380] sm:$0xff]
    %v1226 = vld [vmem:[#allocation4 + $0x388] sm:$0xff]
    %v1227 = vld [vmem:[#allocation4 + $0x390] sm:$0xff]
    %v1228 = vld [vmem:[#allocation4 + $0x398] sm:$0xff]
    %v1229 = vld [vmem:[#allocation4 + $0x3a0] sm:$0xff]
    %v1230 = vld [vmem:[#allocation4 + $0x3a8] sm:$0xff]
    %v1231 = vld [vmem:[#allocation4 + $0x3b0] sm:$0xff]
    %v1232 = vld [vmem:[#allocation4 + $0x3b8] sm:$0xff]
    %v1233 = vld [vmem:[#allocation4 + $0x3c0] sm:$0xff]
    %v1234 = vld [vmem:[#allocation4 + $0x3c8] sm:$0xff]
    %v1235 = vld [vmem:[#allocation4 + $0x3d0] sm:$0xff]
    %v1236 = vld [vmem:[#allocation4 + $0x3d8] sm:$0xff]
    %v1237 = vld [vmem:[#allocation4 + $0x3e0] sm:$0xff]
    %v1238 = vld [vmem:[#allocation4 + $0x3e8] sm:$0xff]
    %v1239 = vld [vmem:[#allocation4 + $0x3f0] sm:$0xff]
    %v1240 = vld [vmem:[#allocation4 + $0x3f8] sm:$0xff]
    %v1241 = vld [vmem:[#allocation4 + $0x400] sm:$0xff]
    %v1242 = vld [vmem:[#allocation4 + $0x408] sm:$0xff]
    %v1243 = vld [vmem:[#allocation4 + $0x410] sm:$0xff]
    %v1244 = vld [vmem:[#allocation4 + $0x418] sm:$0xff]
    %v1245 = vld [vmem:[#allocation4 + $0x420] sm:$0xff]
    %v1246 = vld [vmem:[#allocation4 + $0x428] sm:$0xff]
    %v1247 = vld [vmem:[#allocation4 + $0x430] sm:$0xff]
    %v1248 = vld [vmem:[#allocation4 + $0x438] sm:$0xff]
    %v1249 = vld [vmem:[#allocation4 + $0x440] sm:$0xff]
    %v1250 = vld [vmem:[#allocation4 + $0x448] sm:$0xff]
    %v1251 = vld [vmem:[#allocation4 + $0x450] sm:$0xff]
    %v1252 = vld [vmem:[#allocation4 + $0x458] sm:$0xff]
    %v1253 = vld [vmem:[#allocation4 + $0x460] sm:$0xff]
    %v1254 = vld [vmem:[#allocation4 + $0x468] sm:$0xff]
    %v1255 = vld [vmem:[#allocation4 + $0x470] sm:$0xff]
    %v1256 = vld [vmem:[#allocation4 + $0x478] sm:$0xff]
    %v1257 = vld [vmem:[#allocation4 + $0x480] sm:$0xff]
    %v1258 = vld [vmem:[#allocation4 + $0x488] sm:$0xff]
    %v1259 = vld [vmem:[#allocation4 + $0x490] sm:$0xff]
    %v1260 = vld [vmem:[#allocation4 + $0x498] sm:$0xff]
    %v1261 = vld [vmem:[#allocation4 + $0x4a0] sm:$0xff]
    %v1262 = vld [vmem:[#allocation4 + $0x4a8] sm:$0xff]
    %v1263 = vld [vmem:[#allocation4 + $0x4b0] sm:$0xff]
    %v1264 = vld [vmem:[#allocation4 + $0x4b8] sm:$0xff]
    %v1265 = vld [vmem:[#allocation4 + $0x4c0] sm:$0xff]
    %v1266 = vld [vmem:[#allocation4 + $0x4c8] sm:$0xff]
    %v1267 = vld [vmem:[#allocation4 + $0x4d0] sm:$0xff]
    %v1268 = vld [vmem:[#allocation4 + $0x4d8] sm:$0xff]
    %v1269 = vld [vmem:[#allocation4 + $0x4e0] sm:$0xff]
    %v1270 = vld [vmem:[#allocation4 + $0x4e8] sm:$0xff]
    %v1271 = vld [vmem:[#allocation4 + $0x4f0] sm:$0xff]
    %v1272 = vld [vmem:[#allocation4 + $0x4f8] sm:$0xff]
    %v1273 = vld [vmem:[#allocation4 + $0x500] sm:$0xff]
    %v1274 = vld [vmem:[#allocation4 + $0x508] sm:$0xff]
    %v1275 = vld [vmem:[#allocation4 + $0x510] sm:$0xff]
    %v1276 = vld [vmem:[#allocation4 + $0x518] sm:$0xff]
    %v1277 = vld [vmem:[#allocation4 + $0x520] sm:$0xff]
    %v1278 = vld [vmem:[#allocation4 + $0x528] sm:$0xff]
    %v1279 = vld [vmem:[#allocation4 + $0x530] sm:$0xff]
    %v1280 = vld [vmem:[#allocation4 + $0x538] sm:$0xff]
    %v1281 = vld [vmem:[#allocation4 + $0x540] sm:$0xff]
    %v1282 = vld [vmem:[#allocation4 + $0x548] sm:$0xff]
    %v1283 = vld [vmem:[#allocation4 + $0x550] sm:$0xff]
    %v1284 = vld [vmem:[#allocation4 + $0x558] sm:$0xff]
    %v1285 = vld [vmem:[#allocation4 + $0x560] sm:$0xff]
    %v1286 = vld [vmem:[#allocation4 + $0x568] sm:$0xff]
    %v1287 = vld [vmem:[#allocation4 + $0x570] sm:$0xff]
    %v1288 = vld [vmem:[#allocation4 + $0x578] sm:$0xff]
    %v1289 = vld [vmem:[#allocation4 + $0x580] sm:$0xff]
    %v1290 = vld [vmem:[#allocation4 + $0x588] sm:$0xff]
    %v1291 = vld [vmem:[#allocation4 + $0x590] sm:$0xff]
    %v1292 = vld [vmem:[#allocation4 + $0x598] sm:$0xff]
    %v1293 = vld [vmem:[#allocation4 + $0x5a0] sm:$0xff]
    %v1294 = vld [vmem:[#allocation4 + $0x5a8] sm:$0xff]
    %v1295 = vld [vmem:[#allocation4 + $0x5b0] sm:$0xff]
    %v1296 = vld [vmem:[#allocation4 + $0x5b8] sm:$0xff]
    %v1297 = vld [vmem:[#allocation4 + $0x5c0] sm:$0xff]
    %v1298 = vld [vmem:[#allocation4 + $0x5c8] sm:$0xff]
    %v1299 = vld [vmem:[#allocation4 + $0x5d0] sm:$0xff]
    %v1300 = vld [vmem:[#allocation4 + $0x5d8] sm:$0xff]
    %v1301 = vld [vmem:[#allocation4 + $0x5e0] sm:$0xff]
    %v1302 = vld [vmem:[#allocation4 + $0x5e8] sm:$0xff]
    %v1303 = vld [vmem:[#allocation4 + $0x5f0] sm:$0xff]
    %v1304 = vld [vmem:[#allocation4 + $0x5f8] sm:$0xff]
    %v1305 = vld [vmem:[#allocation4 + $0x600] sm:$0xff]
    %v1306 = vld [vmem:[#allocation4 + $0x608] sm:$0xff]
    %v1307 = vld [vmem:[#allocation4 + $0x610] sm:$0xff]
    %v1308 = vld [vmem:[#allocation4 + $0x618] sm:$0xff]
    %v1309 = vld [vmem:[#allocation4 + $0x620] sm:$0xff]
    %v1310 = vld [vmem:[#allocation4 + $0x628] sm:$0xff]
    %v1311 = vld [vmem:[#allocation4 + $0x630] sm:$0xff]
    %v1312 = vld [vmem:[#allocation4 + $0x638] sm:$0xff]
    %v1313 = vld [vmem:[#allocation4 + $0x640] sm:$0xff]
    %v1314 = vld [vmem:[#allocation4 + $0x648] sm:$0xff]
    %v1315 = vld [vmem:[#allocation4 + $0x650] sm:$0xff]
    %v1316 = vld [vmem:[#allocation4 + $0x658] sm:$0xff]
    %v1317 = vld [vmem:[#allocation4 + $0x660] sm:$0xff]
    %v1318 = vld [vmem:[#allocation4 + $0x668] sm:$0xff]
    %v1319 = vld [vmem:[#allocation4 + $0x670] sm:$0xff]
    %v1320 = vld [vmem:[#allocation4 + $0x678] sm:$0xff]
    %v1321 = vld [vmem:[#allocation4 + $0x680] sm:$0xff]
    %v1322 = vld [vmem:[#allocation4 + $0x688] sm:$0xff]
    %v1323 = vld [vmem:[#allocation4 + $0x690] sm:$0xff]
    %v1324 = vld [vmem:[#allocation4 + $0x698] sm:$0xff]
    %v1325 = vld [vmem:[#allocation4 + $0x6a0] sm:$0xff]
    %v1326 = vld [vmem:[#allocation4 + $0x6a8] sm:$0xff]
    %v1327 = vld [vmem:[#allocation4 + $0x6b0] sm:$0xff]
    %v1328 = vld [vmem:[#allocation4 + $0x6b8] sm:$0xff]
    %v1329 = vld [vmem:[#allocation4 + $0x6c0] sm:$0xff]
    %v1330 = vld [vmem:[#allocation4 + $0x6c8] sm:$0xff]
    %v1331 = vld [vmem:[#allocation4 + $0x6d0] sm:$0xff]
    %v1332 = vld [vmem:[#allocation4 + $0x6d8] sm:$0xff]
    %v1333 = vld [vmem:[#allocation4 + $0x6e0] sm:$0xff]
    %v1334 = vld [vmem:[#allocation4 + $0x6e8] sm:$0xff]
    %v1335 = vld [vmem:[#allocation4 + $0x6f0] sm:$0xff]
    %v1336 = vld [vmem:[#allocation4 + $0x6f8] sm:$0xff]
    %v1337 = vld [vmem:[#allocation4 + $0x700] sm:$0xff]
    %v1338 = vld [vmem:[#allocation4 + $0x708] sm:$0xff]
    %v1339 = vld [vmem:[#allocation4 + $0x710] sm:$0xff]
    %v1340 = vld [vmem:[#allocation4 + $0x718] sm:$0xff]
    %v1341 = vld [vmem:[#allocation4 + $0x720] sm:$0xff]
    %v1342 = vld [vmem:[#allocation4 + $0x728] sm:$0xff]
    %v1343 = vld [vmem:[#allocation4 + $0x730] sm:$0xff]
    %v1344 = vld [vmem:[#allocation4 + $0x738] sm:$0xff]
    %v1345 = vld [vmem:[#allocation4 + $0x740] sm:$0xff]
    %v1346 = vld [vmem:[#allocation4 + $0x748] sm:$0xff]
    %v1347 = vld [vmem:[#allocation4 + $0x750] sm:$0xff]
    %v1348 = vld [vmem:[#allocation4 + $0x758] sm:$0xff]
    %v1349 = vld [vmem:[#allocation4 + $0x760] sm:$0xff]
    %v1350 = vld [vmem:[#allocation4 + $0x768] sm:$0xff]
    %v1351 = vld [vmem:[#allocation4 + $0x770] sm:$0xff]
    %v1352 = vld [vmem:[#allocation4 + $0x778] sm:$0xff]
    %v1353 = vld [vmem:[#allocation4 + $0x780] sm:$0xff]
    %v1354 = vld [vmem:[#allocation4 + $0x788] sm:$0xff]
    %v1355 = vld [vmem:[#allocation4 + $0x790] sm:$0xff]
    %v1356 = vld [vmem:[#allocation4 + $0x798] sm:$0xff]
    %v1357 = vld [vmem:[#allocation4 + $0x7a0] sm:$0xff]
    %v1358 = vld [vmem:[#allocation4 + $0x7a8] sm:$0xff]
    %v1359 = vld [vmem:[#allocation4 + $0x7b0] sm:$0xff]
    %v1360 = vld [vmem:[#allocation4 + $0x7b8] sm:$0xff]
    %v1361 = vld [vmem:[#allocation4 + $0x7c0] sm:$0xff]
    %v1362 = vld [vmem:[#allocation4 + $0x7c8] sm:$0xff]
    %v1363 = vld [vmem:[#allocation4 + $0x7d0] sm:$0xff]
    %v1364 = vld [vmem:[#allocation4 + $0x7d8] sm:$0xff]
    %v1365 = vld [vmem:[#allocation4 + $0x7e0] sm:$0xff]
    %v1366 = vld [vmem:[#allocation4 + $0x7e8] sm:$0xff]
    %v1367 = vld [vmem:[#allocation4 + $0x7f0] sm:$0xff]
    %v1368 = vld [vmem:[#allocation4 + $0x7f8] sm:$0xff]
    %v1369 = vld [vmem:[%s4] sm:$0xf]
    %v1371 = vperm.slane %v1369, 0
    %v1372 = vperm.slane %v1369, 1
    %v1373 = vperm.slane %v1369, 2
    %v1374 = vperm.slane %v1369, 3
    %v1635 = vunpack.c.l.b16 %v1113
    %v1636 = vunpack.c.h.b16 %v1113
    %v1637 = vunpack.c.l.b16 %v1114
    %v1638 = vunpack.c.h.b16 %v1114
    %v1639 = vunpack.c.l.b16 %v1115
    %v1640 = vunpack.c.h.b16 %v1115
    %v1641 = vunpack.c.l.b16 %v1116
    %v1642 = vunpack.c.h.b16 %v1116
    %v1643 = vunpack.c.l.b16 %v1117
    %v1644 = vunpack.c.h.b16 %v1117
    %v1645 = vunpack.c.l.b16 %v1118
    %v1646 = vunpack.c.h.b16 %v1118
    %v1647 = vunpack.c.l.b16 %v1119
    %v1648 = vunpack.c.h.b16 %v1119
    %v1649 = vunpack.c.l.b16 %v1120
    %v1650 = vunpack.c.h.b16 %v1120
    %v1651 = vunpack.c.l.b16 %v1121
    %v1652 = vunpack.c.h.b16 %v1121
    %v1653 = vunpack.c.l.b16 %v1122
    %v1654 = vunpack.c.h.b16 %v1122
    %v1655 = vunpack.c.l.b16 %v1123
    %v1656 = vunpack.c.h.b16 %v1123
    %v1657 = vunpack.c.l.b16 %v1124
    %v1658 = vunpack.c.h.b16 %v1124
    %v1659 = vunpack.c.l.b16 %v1125
    %v1660 = vunpack.c.h.b16 %v1125
    %v1661 = vunpack.c.l.b16 %v1126
    %v1662 = vunpack.c.h.b16 %v1126
    %v1663 = vunpack.c.l.b16 %v1127
    %v1664 = vunpack.c.h.b16 %v1127
    %v1665 = vunpack.c.l.b16 %v1128
    %v1666 = vunpack.c.h.b16 %v1128
    %v1667 = vunpack.c.l.b16 %v1129
    %v1668 = vunpack.c.h.b16 %v1129
    %v1669 = vunpack.c.l.b16 %v1130
    %v1670 = vunpack.c.h.b16 %v1130
    %v1671 = vunpack.c.l.b16 %v1131
    %v1672 = vunpack.c.h.b16 %v1131
    %v1673 = vunpack.c.l.b16 %v1132
    %v1674 = vunpack.c.h.b16 %v1132
    %v1675 = vunpack.c.l.b16 %v1133
    %v1676 = vunpack.c.h.b16 %v1133
    %v1677 = vunpack.c.l.b16 %v1134
    %v1678 = vunpack.c.h.b16 %v1134
    %v1679 = vunpack.c.l.b16 %v1135
    %v1680 = vunpack.c.h.b16 %v1135
    %v1681 = vunpack.c.l.b16 %v1136
    %v1682 = vunpack.c.h.b16 %v1136
    %v1683 = vunpack.c.l.b16 %v1137
    %v1684 = vunpack.c.h.b16 %v1137
    %v1685 = vunpack.c.l.b16 %v1138
    %v1686 = vunpack.c.h.b16 %v1138
    %v1687 = vunpack.c.l.b16 %v1139
    %v1688 = vunpack.c.h.b16 %v1139
    %v1689 = vunpack.c.l.b16 %v1140
    %v1690 = vunpack.c.h.b16 %v1140
    %v1691 = vunpack.c.l.b16 %v1141
    %v1692 = vunpack.c.h.b16 %v1141
    %v1693 = vunpack.c.l.b16 %v1142
    %v1694 = vunpack.c.h.b16 %v1142
    %v1695 = vunpack.c.l.b16 %v1143
    %v1696 = vunpack.c.h.b16 %v1143
    %v1697 = vunpack.c.l.b16 %v1144
    %v1698 = vunpack.c.h.b16 %v1144
    %v1699 = vunpack.c.l.b16 %v1145
    %v1700 = vunpack.c.h.b16 %v1145
    %v1701 = vunpack.c.l.b16 %v1146
    %v1702 = vunpack.c.h.b16 %v1146
    %v1703 = vunpack.c.l.b16 %v1147
    %v1704 = vunpack.c.h.b16 %v1147
    %v1705 = vunpack.c.l.b16 %v1148
    %v1706 = vunpack.c.h.b16 %v1148
    %v1707 = vunpack.c.l.b16 %v1149
    %v1708 = vunpack.c.h.b16 %v1149
    %v1709 = vunpack.c.l.b16 %v1150
    %v1710 = vunpack.c.h.b16 %v1150
    %v1711 = vunpack.c.l.b16 %v1151
    %v1712 = vunpack.c.h.b16 %v1151
    %v1713 = vunpack.c.l.b16 %v1152
    %v1714 = vunpack.c.h.b16 %v1152
    %v1715 = vunpack.c.l.b16 %v1153
    %v1716 = vunpack.c.h.b16 %v1153
    %v1717 = vunpack.c.l.b16 %v1154
    %v1718 = vunpack.c.h.b16 %v1154
    %v1719 = vunpack.c.l.b16 %v1155
    %v1720 = vunpack.c.h.b16 %v1155
    %v1721 = vunpack.c.l.b16 %v1156
    %v1722 = vunpack.c.h.b16 %v1156
    %v1723 = vunpack.c.l.b16 %v1157
    %v1724 = vunpack.c.h.b16 %v1157
    %v1725 = vunpack.c.l.b16 %v1158
    %v1726 = vunpack.c.h.b16 %v1158
    %v1727 = vunpack.c.l.b16 %v1159
    %v1728 = vunpack.c.h.b16 %v1159
    %v1729 = vunpack.c.l.b16 %v1160
    %v1730 = vunpack.c.h.b16 %v1160
    %v1731 = vunpack.c.l.b16 %v1161
    %v1732 = vunpack.c.h.b16 %v1161
    %v1733 = vunpack.c.l.b16 %v1162
    %v1734 = vunpack.c.h.b16 %v1162
    %v1735 = vunpack.c.l.b16 %v1163
    %v1736 = vunpack.c.h.b16 %v1163
    %v1737 = vunpack.c.l.b16 %v1164
    %v1738 = vunpack.c.h.b16 %v1164
    %v1739 = vunpack.c.l.b16 %v1165
    %v1740 = vunpack.c.h.b16 %v1165
    %v1741 = vunpack.c.l.b16 %v1166
    %v1742 = vunpack.c.h.b16 %v1166
    %v1743 = vunpack.c.l.b16 %v1167
    %v1744 = vunpack.c.h.b16 %v1167
    %v1745 = vunpack.c.l.b16 %v1168
    %v1746 = vunpack.c.h.b16 %v1168
    %v1747 = vunpack.c.l.b16 %v1169
    %v1748 = vunpack.c.h.b16 %v1169
    %v1749 = vunpack.c.l.b16 %v1170
    %v1750 = vunpack.c.h.b16 %v1170
    %v1751 = vunpack.c.l.b16 %v1171
    %v1752 = vunpack.c.h.b16 %v1171
    %v1753 = vunpack.c.l.b16 %v1172
    %v1754 = vunpack.c.h.b16 %v1172
    %v1755 = vunpack.c.l.b16 %v1173
    %v1756 = vunpack.c.h.b16 %v1173
    %v1757 = vunpack.c.l.b16 %v1174
    %v1758 = vunpack.c.h.b16 %v1174
    %v1759 = vunpack.c.l.b16 %v1175
    %v1760 = vunpack.c.h.b16 %v1175
    %v1761 = vunpack.c.l.b16 %v1176
    %v1762 = vunpack.c.h.b16 %v1176
    %v1763 = vunpack.c.l.b16 %v1177
    %v1764 = vunpack.c.h.b16 %v1177
    %v1765 = vunpack.c.l.b16 %v1178
    %v1766 = vunpack.c.h.b16 %v1178
    %v1767 = vunpack.c.l.b16 %v1179
    %v1768 = vunpack.c.h.b16 %v1179
    %v1769 = vunpack.c.l.b16 %v1180
    %v1770 = vunpack.c.h.b16 %v1180
    %v1771 = vunpack.c.l.b16 %v1181
    %v1772 = vunpack.c.h.b16 %v1181
    %v1773 = vunpack.c.l.b16 %v1182
    %v1774 = vunpack.c.h.b16 %v1182
    %v1775 = vunpack.c.l.b16 %v1183
    %v1776 = vunpack.c.h.b16 %v1183
    %v1777 = vunpack.c.l.b16 %v1184
    %v1778 = vunpack.c.h.b16 %v1184
    %v1779 = vunpack.c.l.b16 %v1185
    %v1780 = vunpack.c.h.b16 %v1185
    %v1781 = vunpack.c.l.b16 %v1186
    %v1782 = vunpack.c.h.b16 %v1186
    %v1783 = vunpack.c.l.b16 %v1187
    %v1784 = vunpack.c.h.b16 %v1187
    %v1785 = vunpack.c.l.b16 %v1188
    %v1786 = vunpack.c.h.b16 %v1188
    %v1787 = vunpack.c.l.b16 %v1189
    %v1788 = vunpack.c.h.b16 %v1189
    %v1789 = vunpack.c.l.b16 %v1190
    %v1790 = vunpack.c.h.b16 %v1190
    %v1791 = vunpack.c.l.b16 %v1191
    %v1792 = vunpack.c.h.b16 %v1191
    %v1793 = vunpack.c.l.b16 %v1192
    %v1794 = vunpack.c.h.b16 %v1192
    %v1795 = vunpack.c.l.b16 %v1193
    %v1796 = vunpack.c.h.b16 %v1193
    %v1797 = vunpack.c.l.b16 %v1194
    %v1798 = vunpack.c.h.b16 %v1194
    %v1799 = vunpack.c.l.b16 %v1195
    %v1800 = vunpack.c.h.b16 %v1195
    %v1801 = vunpack.c.l.b16 %v1196
    %v1802 = vunpack.c.h.b16 %v1196
    %v1803 = vunpack.c.l.b16 %v1197
    %v1804 = vunpack.c.h.b16 %v1197
    %v1805 = vunpack.c.l.b16 %v1198
    %v1806 = vunpack.c.h.b16 %v1198
    %v1807 = vunpack.c.l.b16 %v1199
    %v1808 = vunpack.c.h.b16 %v1199
    %v1809 = vunpack.c.l.b16 %v1200
    %v1810 = vunpack.c.h.b16 %v1200
    %v1811 = vunpack.c.l.b16 %v1201
    %v1812 = vunpack.c.h.b16 %v1201
    %v1813 = vunpack.c.l.b16 %v1202
    %v1814 = vunpack.c.h.b16 %v1202
    %v1815 = vunpack.c.l.b16 %v1203
    %v1816 = vunpack.c.h.b16 %v1203
    %v1817 = vunpack.c.l.b16 %v1204
    %v1818 = vunpack.c.h.b16 %v1204
    %v1819 = vunpack.c.l.b16 %v1205
    %v1820 = vunpack.c.h.b16 %v1205
    %v1821 = vunpack.c.l.b16 %v1206
    %v1822 = vunpack.c.h.b16 %v1206
    %v1823 = vunpack.c.l.b16 %v1207
    %v1824 = vunpack.c.h.b16 %v1207
    %v1825 = vunpack.c.l.b16 %v1208
    %v1826 = vunpack.c.h.b16 %v1208
    %v1827 = vunpack.c.l.b16 %v1209
    %v1828 = vunpack.c.h.b16 %v1209
    %v1829 = vunpack.c.l.b16 %v1210
    %v1830 = vunpack.c.h.b16 %v1210
    %v1831 = vunpack.c.l.b16 %v1211
    %v1832 = vunpack.c.h.b16 %v1211
    %v1833 = vunpack.c.l.b16 %v1212
    %v1834 = vunpack.c.h.b16 %v1212
    %v1835 = vunpack.c.l.b16 %v1213
    %v1836 = vunpack.c.h.b16 %v1213
    %v1837 = vunpack.c.l.b16 %v1214
    %v1838 = vunpack.c.h.b16 %v1214
    %v1839 = vunpack.c.l.b16 %v1215
    %v1840 = vunpack.c.h.b16 %v1215
    %v1841 = vunpack.c.l.b16 %v1216
    %v1842 = vunpack.c.h.b16 %v1216
    %v1843 = vunpack.c.l.b16 %v1217
    %v1844 = vunpack.c.h.b16 %v1217
    %v1845 = vunpack.c.l.b16 %v1218
    %v1846 = vunpack.c.h.b16 %v1218
    %v1847 = vunpack.c.l.b16 %v1219
    %v1848 = vunpack.c.h.b16 %v1219
    %v1849 = vunpack.c.l.b16 %v1220
    %v1850 = vunpack.c.h.b16 %v1220
    %v1851 = vunpack.c.l.b16 %v1221
    %v1852 = vunpack.c.h.b16 %v1221
    %v1853 = vunpack.c.l.b16 %v1222
    %v1854 = vunpack.c.h.b16 %v1222
    %v1855 = vunpack.c.l.b16 %v1223
    %v1856 = vunpack.c.h.b16 %v1223
    %v1857 = vunpack.c.l.b16 %v1224
    %v1858 = vunpack.c.h.b16 %v1224
    %v1859 = vunpack.c.l.b16 %v1225
    %v1860 = vunpack.c.h.b16 %v1225
    %v1861 = vunpack.c.l.b16 %v1226
    %v1862 = vunpack.c.h.b16 %v1226
    %v1863 = vunpack.c.l.b16 %v1227
    %v1864 = vunpack.c.h.b16 %v1227
    %v1865 = vunpack.c.l.b16 %v1228
    %v1866 = vunpack.c.h.b16 %v1228
    %v1867 = vunpack.c.l.b16 %v1229
    %v1868 = vunpack.c.h.b16 %v1229
    %v1869 = vunpack.c.l.b16 %v1230
    %v1870 = vunpack.c.h.b16 %v1230
    %v1871 = vunpack.c.l.b16 %v1231
    %v1872 = vunpack.c.h.b16 %v1231
    %v1873 = vunpack.c.l.b16 %v1232
    %v1874 = vunpack.c.h.b16 %v1232
    %v1875 = vunpack.c.l.b16 %v1233
    %v1876 = vunpack.c.h.b16 %v1233
    %v1877 = vunpack.c.l.b16 %v1234
    %v1878 = vunpack.c.h.b16 %v1234
    %v1879 = vunpack.c.l.b16 %v1235
    %v1880 = vunpack.c.h.b16 %v1235
    %v1881 = vunpack.c.l.b16 %v1236
    %v1882 = vunpack.c.h.b16 %v1236
    %v1883 = vunpack.c.l.b16 %v1237
    %v1884 = vunpack.c.h.b16 %v1237
    %v1885 = vunpack.c.l.b16 %v1238
    %v1886 = vunpack.c.h.b16 %v1238
    %v1887 = vunpack.c.l.b16 %v1239
    %v1888 = vunpack.c.h.b16 %v1239
    %v1889 = vunpack.c.l.b16 %v1240
    %v1890 = vunpack.c.h.b16 %v1240
    %v1891 = vunpack.c.l.b16 %v1241
    %v1892 = vunpack.c.h.b16 %v1241
    %v1893 = vunpack.c.l.b16 %v1242
    %v1894 = vunpack.c.h.b16 %v1242
    %v1895 = vunpack.c.l.b16 %v1243
    %v1896 = vunpack.c.h.b16 %v1243
    %v1897 = vunpack.c.l.b16 %v1244
    %v1898 = vunpack.c.h.b16 %v1244
    %v1899 = vunpack.c.l.b16 %v1245
    %v1900 = vunpack.c.h.b16 %v1245
    %v1901 = vunpack.c.l.b16 %v1246
    %v1902 = vunpack.c.h.b16 %v1246
    %v1903 = vunpack.c.l.b16 %v1247
    %v1904 = vunpack.c.h.b16 %v1247
    %v1905 = vunpack.c.l.b16 %v1248
    %v1906 = vunpack.c.h.b16 %v1248
    %v1907 = vunpack.c.l.b16 %v1249
    %v1908 = vunpack.c.h.b16 %v1249
    %v1909 = vunpack.c.l.b16 %v1250
    %v1910 = vunpack.c.h.b16 %v1250
    %v1911 = vunpack.c.l.b16 %v1251
    %v1912 = vunpack.c.h.b16 %v1251
    %v1913 = vunpack.c.l.b16 %v1252
    %v1914 = vunpack.c.h.b16 %v1252
    %v1915 = vunpack.c.l.b16 %v1253
    %v1916 = vunpack.c.h.b16 %v1253
    %v1917 = vunpack.c.l.b16 %v1254
    %v1918 = vunpack.c.h.b16 %v1254
    %v1919 = vunpack.c.l.b16 %v1255
    %v1920 = vunpack.c.h.b16 %v1255
    %v1921 = vunpack.c.l.b16 %v1256
    %v1922 = vunpack.c.h.b16 %v1256
    %v1923 = vunpack.c.l.b16 %v1257
    %v1924 = vunpack.c.h.b16 %v1257
    %v1925 = vunpack.c.l.b16 %v1258
    %v1926 = vunpack.c.h.b16 %v1258
    %v1927 = vunpack.c.l.b16 %v1259
    %v1928 = vunpack.c.h.b16 %v1259
    %v1929 = vunpack.c.l.b16 %v1260
    %v1930 = vunpack.c.h.b16 %v1260
    %v1931 = vunpack.c.l.b16 %v1261
    %v1932 = vunpack.c.h.b16 %v1261
    %v1933 = vunpack.c.l.b16 %v1262
    %v1934 = vunpack.c.h.b16 %v1262
    %v1935 = vunpack.c.l.b16 %v1263
    %v1936 = vunpack.c.h.b16 %v1263
    %v1937 = vunpack.c.l.b16 %v1264
    %v1938 = vunpack.c.h.b16 %v1264
    %v1939 = vunpack.c.l.b16 %v1265
    %v1940 = vunpack.c.h.b16 %v1265
    %v1941 = vunpack.c.l.b16 %v1266
    %v1942 = vunpack.c.h.b16 %v1266
    %v1943 = vunpack.c.l.b16 %v1267
    %v1944 = vunpack.c.h.b16 %v1267
    %v1945 = vunpack.c.l.b16 %v1268
    %v1946 = vunpack.c.h.b16 %v1268
    %v1947 = vunpack.c.l.b16 %v1269
    %v1948 = vunpack.c.h.b16 %v1269
    %v1949 = vunpack.c.l.b16 %v1270
    %v1950 = vunpack.c.h.b16 %v1270
    %v1951 = vunpack.c.l.b16 %v1271
    %v1952 = vunpack.c.h.b16 %v1271
    %v1953 = vunpack.c.l.b16 %v1272
    %v1954 = vunpack.c.h.b16 %v1272
    %v1955 = vunpack.c.l.b16 %v1273
    %v1956 = vunpack.c.h.b16 %v1273
    %v1957 = vunpack.c.l.b16 %v1274
    %v1958 = vunpack.c.h.b16 %v1274
    %v1959 = vunpack.c.l.b16 %v1275
    %v1960 = vunpack.c.h.b16 %v1275
    %v1961 = vunpack.c.l.b16 %v1276
    %v1962 = vunpack.c.h.b16 %v1276
    %v1963 = vunpack.c.l.b16 %v1277
    %v1964 = vunpack.c.h.b16 %v1277
    %v1965 = vunpack.c.l.b16 %v1278
    %v1966 = vunpack.c.h.b16 %v1278
    %v1967 = vunpack.c.l.b16 %v1279
    %v1968 = vunpack.c.h.b16 %v1279
    %v1969 = vunpack.c.l.b16 %v1280
    %v1970 = vunpack.c.h.b16 %v1280
    %v1971 = vunpack.c.l.b16 %v1281
    %v1972 = vunpack.c.h.b16 %v1281
    %v1973 = vunpack.c.l.b16 %v1282
    %v1974 = vunpack.c.h.b16 %v1282
    %v1975 = vunpack.c.l.b16 %v1283
    %v1976 = vunpack.c.h.b16 %v1283
    %v1977 = vunpack.c.l.b16 %v1284
    %v1978 = vunpack.c.h.b16 %v1284
    %v1979 = vunpack.c.l.b16 %v1285
    %v1980 = vunpack.c.h.b16 %v1285
    %v1981 = vunpack.c.l.b16 %v1286
    %v1982 = vunpack.c.h.b16 %v1286
    %v1983 = vunpack.c.l.b16 %v1287
    %v1984 = vunpack.c.h.b16 %v1287
    %v1985 = vunpack.c.l.b16 %v1288
    %v1986 = vunpack.c.h.b16 %v1288
    %v1987 = vunpack.c.l.b16 %v1289
    %v1988 = vunpack.c.h.b16 %v1289
    %v1989 = vunpack.c.l.b16 %v1290
    %v1990 = vunpack.c.h.b16 %v1290
    %v1991 = vunpack.c.l.b16 %v1291
    %v1992 = vunpack.c.h.b16 %v1291
    %v1993 = vunpack.c.l.b16 %v1292
    %v1994 = vunpack.c.h.b16 %v1292
    %v1995 = vunpack.c.l.b16 %v1293
    %v1996 = vunpack.c.h.b16 %v1293
    %v1997 = vunpack.c.l.b16 %v1294
    %v1998 = vunpack.c.h.b16 %v1294
    %v1999 = vunpack.c.l.b16 %v1295
    %v2000 = vunpack.c.h.b16 %v1295
    %v2001 = vunpack.c.l.b16 %v1296
    %v2002 = vunpack.c.h.b16 %v1296
    %v2003 = vunpack.c.l.b16 %v1297
    %v2004 = vunpack.c.h.b16 %v1297
    %v2005 = vunpack.c.l.b16 %v1298
    %v2006 = vunpack.c.h.b16 %v1298
    %v2007 = vunpack.c.l.b16 %v1299
    %v2008 = vunpack.c.h.b16 %v1299
    %v2009 = vunpack.c.l.b16 %v1300
    %v2010 = vunpack.c.h.b16 %v1300
    %v2011 = vunpack.c.l.b16 %v1301
    %v2012 = vunpack.c.h.b16 %v1301
    %v2013 = vunpack.c.l.b16 %v1302
    %v2014 = vunpack.c.h.b16 %v1302
    %v2015 = vunpack.c.l.b16 %v1303
    %v2016 = vunpack.c.h.b16 %v1303
    %v2017 = vunpack.c.l.b16 %v1304
    %v2018 = vunpack.c.h.b16 %v1304
    %v2019 = vunpack.c.l.b16 %v1305
    %v2020 = vunpack.c.h.b16 %v1305
    %v2021 = vunpack.c.l.b16 %v1306
    %v2022 = vunpack.c.h.b16 %v1306
    %v2023 = vunpack.c.l.b16 %v1307
    %v2024 = vunpack.c.h.b16 %v1307
    %v2025 = vunpack.c.l.b16 %v1308
    %v2026 = vunpack.c.h.b16 %v1308
    %v2027 = vunpack.c.l.b16 %v1309
    %v2028 = vunpack.c.h.b16 %v1309
    %v2029 = vunpack.c.l.b16 %v1310
    %v2030 = vunpack.c.h.b16 %v1310
    %v2031 = vunpack.c.l.b16 %v1311
    %v2032 = vunpack.c.h.b16 %v1311
    %v2033 = vunpack.c.l.b16 %v1312
    %v2034 = vunpack.c.h.b16 %v1312
    %v2035 = vunpack.c.l.b16 %v1313
    %v2036 = vunpack.c.h.b16 %v1313
    %v2037 = vunpack.c.l.b16 %v1314
    %v2038 = vunpack.c.h.b16 %v1314
    %v2039 = vunpack.c.l.b16 %v1315
    %v2040 = vunpack.c.h.b16 %v1315
    %v2041 = vunpack.c.l.b16 %v1316
    %v2042 = vunpack.c.h.b16 %v1316
    %v2043 = vunpack.c.l.b16 %v1317
    %v2044 = vunpack.c.h.b16 %v1317
    %v2045 = vunpack.c.l.b16 %v1318
    %v2046 = vunpack.c.h.b16 %v1318
    %v2047 = vunpack.c.l.b16 %v1319
    %v2048 = vunpack.c.h.b16 %v1319
    %v2049 = vunpack.c.l.b16 %v1320
    %v2050 = vunpack.c.h.b16 %v1320
    %v2051 = vunpack.c.l.b16 %v1321
    %v2052 = vunpack.c.h.b16 %v1321
    %v2053 = vunpack.c.l.b16 %v1322
    %v2054 = vunpack.c.h.b16 %v1322
    %v2055 = vunpack.c.l.b16 %v1323
    %v2056 = vunpack.c.h.b16 %v1323
    %v2057 = vunpack.c.l.b16 %v1324
    %v2058 = vunpack.c.h.b16 %v1324
    %v2059 = vunpack.c.l.b16 %v1325
    %v2060 = vunpack.c.h.b16 %v1325
    %v2061 = vunpack.c.l.b16 %v1326
    %v2062 = vunpack.c.h.b16 %v1326
    %v2063 = vunpack.c.l.b16 %v1327
    %v2064 = vunpack.c.h.b16 %v1327
    %v2065 = vunpack.c.l.b16 %v1328
    %v2066 = vunpack.c.h.b16 %v1328
    %v2067 = vunpack.c.l.b16 %v1329
    %v2068 = vunpack.c.h.b16 %v1329
    %v2069 = vunpack.c.l.b16 %v1330
    %v2070 = vunpack.c.h.b16 %v1330
    %v2071 = vunpack.c.l.b16 %v1331
    %v2072 = vunpack.c.h.b16 %v1331
    %v2073 = vunpack.c.l.b16 %v1332
    %v2074 = vunpack.c.h.b16 %v1332
    %v2075 = vunpack.c.l.b16 %v1333
    %v2076 = vunpack.c.h.b16 %v1333
    %v2077 = vunpack.c.l.b16 %v1334
    %v2078 = vunpack.c.h.b16 %v1334
    %v2079 = vunpack.c.l.b16 %v1335
    %v2080 = vunpack.c.h.b16 %v1335
    %v2081 = vunpack.c.l.b16 %v1336
    %v2082 = vunpack.c.h.b16 %v1336
    %v2083 = vunpack.c.l.b16 %v1337
    %v2084 = vunpack.c.h.b16 %v1337
    %v2085 = vunpack.c.l.b16 %v1338
    %v2086 = vunpack.c.h.b16 %v1338
    %v2087 = vunpack.c.l.b16 %v1339
    %v2088 = vunpack.c.h.b16 %v1339
    %v2089 = vunpack.c.l.b16 %v1340
    %v2090 = vunpack.c.h.b16 %v1340
    %v2091 = vunpack.c.l.b16 %v1341
    %v2092 = vunpack.c.h.b16 %v1341
    %v2093 = vunpack.c.l.b16 %v1342
    %v2094 = vunpack.c.h.b16 %v1342
    %v2095 = vunpack.c.l.b16 %v1343
    %v2096 = vunpack.c.h.b16 %v1343
    %v2097 = vunpack.c.l.b16 %v1344
    %v2098 = vunpack.c.h.b16 %v1344
    %v2099 = vunpack.c.l.b16 %v1345
    %v2100 = vunpack.c.h.b16 %v1345
    %v2101 = vunpack.c.l.b16 %v1346
    %v2102 = vunpack.c.h.b16 %v1346
    %v2103 = vunpack.c.l.b16 %v1347
    %v2104 = vunpack.c.h.b16 %v1347
    %v2105 = vunpack.c.l.b16 %v1348
    %v2106 = vunpack.c.h.b16 %v1348
    %v2107 = vunpack.c.l.b16 %v1349
    %v2108 = vunpack.c.h.b16 %v1349
    %v2109 = vunpack.c.l.b16 %v1350
    %v2110 = vunpack.c.h.b16 %v1350
    %v2111 = vunpack.c.l.b16 %v1351
    %v2112 = vunpack.c.h.b16 %v1351
    %v2113 = vunpack.c.l.b16 %v1352
    %v2114 = vunpack.c.h.b16 %v1352
    %v2115 = vunpack.c.l.b16 %v1353
    %v2116 = vunpack.c.h.b16 %v1353
    %v2117 = vunpack.c.l.b16 %v1354
    %v2118 = vunpack.c.h.b16 %v1354
    %v2119 = vunpack.c.l.b16 %v1355
    %v2120 = vunpack.c.h.b16 %v1355
    %v2121 = vunpack.c.l.b16 %v1356
    %v2122 = vunpack.c.h.b16 %v1356
    %v2123 = vunpack.c.l.b16 %v1357
    %v2124 = vunpack.c.h.b16 %v1357
    %v2125 = vunpack.c.l.b16 %v1358
    %v2126 = vunpack.c.h.b16 %v1358
    %v2127 = vunpack.c.l.b16 %v1359
    %v2128 = vunpack.c.h.b16 %v1359
    %v2129 = vunpack.c.l.b16 %v1360
    %v2130 = vunpack.c.h.b16 %v1360
    %v2131 = vunpack.c.l.b16 %v1361
    %v2132 = vunpack.c.h.b16 %v1361
    %v2133 = vunpack.c.l.b16 %v1362
    %v2134 = vunpack.c.h.b16 %v1362
    %v2135 = vunpack.c.l.b16 %v1363
    %v2136 = vunpack.c.h.b16 %v1363
    %v2137 = vunpack.c.l.b16 %v1364
    %v2138 = vunpack.c.h.b16 %v1364
    %v2139 = vunpack.c.l.b16 %v1365
    %v2140 = vunpack.c.h.b16 %v1365
    %v2141 = vunpack.c.l.b16 %v1366
    %v2142 = vunpack.c.h.b16 %v1366
    %v2143 = vunpack.c.l.b16 %v1367
    %v2144 = vunpack.c.h.b16 %v1367
    %v2145 = vunpack.c.l.b16 %v1368
    %v2146 = vunpack.c.h.b16 %v1368
    %v2147 = vpack.c.b16 %v1639, %v1635
    %v2148 = vpack.c.b16 %v1640, %v1636
    %v2149 = vpack.c.b16 %v1641, %v1637
    %v2150 = vpack.c.b16 %v1642, %v1638
    %v2151 = vpack.c.b16 %v1647, %v1643
    %v2152 = vpack.c.b16 %v1648, %v1644
    %v2153 = vpack.c.b16 %v1649, %v1645
    %v2154 = vpack.c.b16 %v1650, %v1646
    %v2155 = vpack.c.b16 %v1655, %v1651
    %v2156 = vpack.c.b16 %v1656, %v1652
    %v2157 = vpack.c.b16 %v1657, %v1653
    %v2158 = vpack.c.b16 %v1658, %v1654
    %v2159 = vpack.c.b16 %v1663, %v1659
    %v2160 = vpack.c.b16 %v1664, %v1660
    %v2161 = vpack.c.b16 %v1665, %v1661
    %v2162 = vpack.c.b16 %v1666, %v1662
    %v2163 = vpack.c.b16 %v1671, %v1667
    %v2164 = vpack.c.b16 %v1672, %v1668
    %v2165 = vpack.c.b16 %v1673, %v1669
    %v2166 = vpack.c.b16 %v1674, %v1670
    %v2167 = vpack.c.b16 %v1679, %v1675
    %v2168 = vpack.c.b16 %v1680, %v1676
    %v2169 = vpack.c.b16 %v1681, %v1677
    %v2170 = vpack.c.b16 %v1682, %v1678
    %v2171 = vpack.c.b16 %v1687, %v1683
    %v2172 = vpack.c.b16 %v1688, %v1684
    %v2173 = vpack.c.b16 %v1689, %v1685
    %v2174 = vpack.c.b16 %v1690, %v1686
    %v2175 = vpack.c.b16 %v1695, %v1691
    %v2176 = vpack.c.b16 %v1696, %v1692
    %v2177 = vpack.c.b16 %v1697, %v1693
    %v2178 = vpack.c.b16 %v1698, %v1694
    %v2179 = vpack.c.b16 %v1703, %v1699
    %v2180 = vpack.c.b16 %v1704, %v1700
    %v2181 = vpack.c.b16 %v1705, %v1701
    %v2182 = vpack.c.b16 %v1706, %v1702
    %v2183 = vpack.c.b16 %v1711, %v1707
    %v2184 = vpack.c.b16 %v1712, %v1708
    %v2185 = vpack.c.b16 %v1713, %v1709
    %v2186 = vpack.c.b16 %v1714, %v1710
    %v2187 = vpack.c.b16 %v1719, %v1715
    %v2188 = vpack.c.b16 %v1720, %v1716
    %v2189 = vpack.c.b16 %v1721, %v1717
    %v2190 = vpack.c.b16 %v1722, %v1718
    %v2191 = vpack.c.b16 %v1727, %v1723
    %v2192 = vpack.c.b16 %v1728, %v1724
    %v2193 = vpack.c.b16 %v1729, %v1725
    %v2194 = vpack.c.b16 %v1730, %v1726
    %v2195 = vpack.c.b16 %v1735, %v1731
    %v2196 = vpack.c.b16 %v1736, %v1732
    %v2197 = vpack.c.b16 %v1737, %v1733
    %v2198 = vpack.c.b16 %v1738, %v1734
    %v2199 = vpack.c.b16 %v1743, %v1739
    %v2200 = vpack.c.b16 %v1744, %v1740
    %v2201 = vpack.c.b16 %v1745, %v1741
    %v2202 = vpack.c.b16 %v1746, %v1742
    %v2203 = vpack.c.b16 %v1751, %v1747
    %v2204 = vpack.c.b16 %v1752, %v1748
    %v2205 = vpack.c.b16 %v1753, %v1749
    %v2206 = vpack.c.b16 %v1754, %v1750
    %v2207 = vpack.c.b16 %v1759, %v1755
    %v2208 = vpack.c.b16 %v1760, %v1756
    %v2209 = vpack.c.b16 %v1761, %v1757
    %v2210 = vpack.c.b16 %v1762, %v1758
    %v2211 = vpack.c.b16 %v1767, %v1763
    %v2212 = vpack.c.b16 %v1768, %v1764
    %v2213 = vpack.c.b16 %v1769, %v1765
    %v2214 = vpack.c.b16 %v1770, %v1766
    %v2215 = vpack.c.b16 %v1775, %v1771
    %v2216 = vpack.c.b16 %v1776, %v1772
    %v2217 = vpack.c.b16 %v1777, %v1773
    %v2218 = vpack.c.b16 %v1778, %v1774
    %v2219 = vpack.c.b16 %v1783, %v1779
    %v2220 = vpack.c.b16 %v1784, %v1780
    %v2221 = vpack.c.b16 %v1785, %v1781
    %v2222 = vpack.c.b16 %v1786, %v1782
    %v2223 = vpack.c.b16 %v1791, %v1787
    %v2224 = vpack.c.b16 %v1792, %v1788
    %v2225 = vpack.c.b16 %v1793, %v1789
    %v2226 = vpack.c.b16 %v1794, %v1790
    %v2227 = vpack.c.b16 %v1799, %v1795
    %v2228 = vpack.c.b16 %v1800, %v1796
    %v2229 = vpack.c.b16 %v1801, %v1797
    %v2230 = vpack.c.b16 %v1802, %v1798
    %v2231 = vpack.c.b16 %v1807, %v1803
    %v2232 = vpack.c.b16 %v1808, %v1804
    %v2233 = vpack.c.b16 %v1809, %v1805
    %v2234 = vpack.c.b16 %v1810, %v1806
    %v2235 = vpack.c.b16 %v1815, %v1811
    %v2236 = vpack.c.b16 %v1816, %v1812
    %v2237 = vpack.c.b16 %v1817, %v1813
    %v2238 = vpack.c.b16 %v1818, %v1814
    %v2239 = vpack.c.b16 %v1823, %v1819
    %v2240 = vpack.c.b16 %v1824, %v1820
    %v2241 = vpack.c.b16 %v1825, %v1821
    %v2242 = vpack.c.b16 %v1826, %v1822
    %v2243 = vpack.c.b16 %v1831, %v1827
    %v2244 = vpack.c.b16 %v1832, %v1828
    %v2245 = vpack.c.b16 %v1833, %v1829
    %v2246 = vpack.c.b16 %v1834, %v1830
    %v2247 = vpack.c.b16 %v1839, %v1835
    %v2248 = vpack.c.b16 %v1840, %v1836
    %v2249 = vpack.c.b16 %v1841, %v1837
    %v2250 = vpack.c.b16 %v1842, %v1838
    %v2251 = vpack.c.b16 %v1847, %v1843
    %v2252 = vpack.c.b16 %v1848, %v1844
    %v2253 = vpack.c.b16 %v1849, %v1845
    %v2254 = vpack.c.b16 %v1850, %v1846
    %v2255 = vpack.c.b16 %v1855, %v1851
    %v2256 = vpack.c.b16 %v1856, %v1852
    %v2257 = vpack.c.b16 %v1857, %v1853
    %v2258 = vpack.c.b16 %v1858, %v1854
    %v2259 = vpack.c.b16 %v1863, %v1859
    %v2260 = vpack.c.b16 %v1864, %v1860
    %v2261 = vpack.c.b16 %v1865, %v1861
    %v2262 = vpack.c.b16 %v1866, %v1862
    %v2263 = vpack.c.b16 %v1871, %v1867
    %v2264 = vpack.c.b16 %v1872, %v1868
    %v2265 = vpack.c.b16 %v1873, %v1869
    %v2266 = vpack.c.b16 %v1874, %v1870
    %v2267 = vpack.c.b16 %v1879, %v1875
    %v2268 = vpack.c.b16 %v1880, %v1876
    %v2269 = vpack.c.b16 %v1881, %v1877
    %v2270 = vpack.c.b16 %v1882, %v1878
    %v2271 = vpack.c.b16 %v1887, %v1883
    %v2272 = vpack.c.b16 %v1888, %v1884
    %v2273 = vpack.c.b16 %v1889, %v1885
    %v2274 = vpack.c.b16 %v1890, %v1886
    %v2275 = vpack.c.b16 %v1895, %v1891
    %v2276 = vpack.c.b16 %v1896, %v1892
    %v2277 = vpack.c.b16 %v1897, %v1893
    %v2278 = vpack.c.b16 %v1898, %v1894
    %v2279 = vpack.c.b16 %v1903, %v1899
    %v2280 = vpack.c.b16 %v1904, %v1900
    %v2281 = vpack.c.b16 %v1905, %v1901
    %v2282 = vpack.c.b16 %v1906, %v1902
    %v2283 = vpack.c.b16 %v1911, %v1907
    %v2284 = vpack.c.b16 %v1912, %v1908
    %v2285 = vpack.c.b16 %v1913, %v1909
    %v2286 = vpack.c.b16 %v1914, %v1910
    %v2287 = vpack.c.b16 %v1919, %v1915
    %v2288 = vpack.c.b16 %v1920, %v1916
    %v2289 = vpack.c.b16 %v1921, %v1917
    %v2290 = vpack.c.b16 %v1922, %v1918
    %v2291 = vpack.c.b16 %v1927, %v1923
    %v2292 = vpack.c.b16 %v1928, %v1924
    %v2293 = vpack.c.b16 %v1929, %v1925
    %v2294 = vpack.c.b16 %v1930, %v1926
    %v2295 = vpack.c.b16 %v1935, %v1931
    %v2296 = vpack.c.b16 %v1936, %v1932
    %v2297 = vpack.c.b16 %v1937, %v1933
    %v2298 = vpack.c.b16 %v1938, %v1934
    %v2299 = vpack.c.b16 %v1943, %v1939
    %v2300 = vpack.c.b16 %v1944, %v1940
    %v2301 = vpack.c.b16 %v1945, %v1941
    %v2302 = vpack.c.b16 %v1946, %v1942
    %v2303 = vpack.c.b16 %v1951, %v1947
    %v2304 = vpack.c.b16 %v1952, %v1948
    %v2305 = vpack.c.b16 %v1953, %v1949
    %v2306 = vpack.c.b16 %v1954, %v1950
    %v2307 = vpack.c.b16 %v1959, %v1955
    %v2308 = vpack.c.b16 %v1960, %v1956
    %v2309 = vpack.c.b16 %v1961, %v1957
    %v2310 = vpack.c.b16 %v1962, %v1958
    %v2311 = vpack.c.b16 %v1967, %v1963
    %v2312 = vpack.c.b16 %v1968, %v1964
    %v2313 = vpack.c.b16 %v1969, %v1965
    %v2314 = vpack.c.b16 %v1970, %v1966
    %v2315 = vpack.c.b16 %v1975, %v1971
    %v2316 = vpack.c.b16 %v1976, %v1972
    %v2317 = vpack.c.b16 %v1977, %v1973
    %v2318 = vpack.c.b16 %v1978, %v1974
    %v2319 = vpack.c.b16 %v1983, %v1979
    %v2320 = vpack.c.b16 %v1984, %v1980
    %v2321 = vpack.c.b16 %v1985, %v1981
    %v2322 = vpack.c.b16 %v1986, %v1982
    %v2323 = vpack.c.b16 %v1991, %v1987
    %v2324 = vpack.c.b16 %v1992, %v1988
    %v2325 = vpack.c.b16 %v1993, %v1989
    %v2326 = vpack.c.b16 %v1994, %v1990
    %v2327 = vpack.c.b16 %v1999, %v1995
    %v2328 = vpack.c.b16 %v2000, %v1996
    %v2329 = vpack.c.b16 %v2001, %v1997
    %v2330 = vpack.c.b16 %v2002, %v1998
    %v2331 = vpack.c.b16 %v2007, %v2003
    %v2332 = vpack.c.b16 %v2008, %v2004
    %v2333 = vpack.c.b16 %v2009, %v2005
    %v2334 = vpack.c.b16 %v2010, %v2006
    %v2335 = vpack.c.b16 %v2015, %v2011
    %v2336 = vpack.c.b16 %v2016, %v2012
    %v2337 = vpack.c.b16 %v2017, %v2013
    %v2338 = vpack.c.b16 %v2018, %v2014
    %v2339 = vpack.c.b16 %v2023, %v2019
    %v2340 = vpack.c.b16 %v2024, %v2020
    %v2341 = vpack.c.b16 %v2025, %v2021
    %v2342 = vpack.c.b16 %v2026, %v2022
    %v2343 = vpack.c.b16 %v2031, %v2027
    %v2344 = vpack.c.b16 %v2032, %v2028
    %v2345 = vpack.c.b16 %v2033, %v2029
    %v2346 = vpack.c.b16 %v2034, %v2030
    %v2347 = vpack.c.b16 %v2039, %v2035
    %v2348 = vpack.c.b16 %v2040, %v2036
    %v2349 = vpack.c.b16 %v2041, %v2037
    %v2350 = vpack.c.b16 %v2042, %v2038
    %v2351 = vpack.c.b16 %v2047, %v2043
    %v2352 = vpack.c.b16 %v2048, %v2044
    %v2353 = vpack.c.b16 %v2049, %v2045
    %v2354 = vpack.c.b16 %v2050, %v2046
    %v2355 = vpack.c.b16 %v2055, %v2051
    %v2356 = vpack.c.b16 %v2056, %v2052
    %v2357 = vpack.c.b16 %v2057, %v2053
    %v2358 = vpack.c.b16 %v2058, %v2054
    %v2359 = vpack.c.b16 %v2063, %v2059
    %v2360 = vpack.c.b16 %v2064, %v2060
    %v2361 = vpack.c.b16 %v2065, %v2061
    %v2362 = vpack.c.b16 %v2066, %v2062
    %v2363 = vpack.c.b16 %v2071, %v2067
    %v2364 = vpack.c.b16 %v2072, %v2068
    %v2365 = vpack.c.b16 %v2073, %v2069
    %v2366 = vpack.c.b16 %v2074, %v2070
    %v2367 = vpack.c.b16 %v2079, %v2075
    %v2368 = vpack.c.b16 %v2080, %v2076
    %v2369 = vpack.c.b16 %v2081, %v2077
    %v2370 = vpack.c.b16 %v2082, %v2078
    %v2371 = vpack.c.b16 %v2087, %v2083
    %v2372 = vpack.c.b16 %v2088, %v2084
    %v2373 = vpack.c.b16 %v2089, %v2085
    %v2374 = vpack.c.b16 %v2090, %v2086
    %v2375 = vpack.c.b16 %v2095, %v2091
    %v2376 = vpack.c.b16 %v2096, %v2092
    %v2377 = vpack.c.b16 %v2097, %v2093
    %v2378 = vpack.c.b16 %v2098, %v2094
    %v2379 = vpack.c.b16 %v2103, %v2099
    %v2380 = vpack.c.b16 %v2104, %v2100
    %v2381 = vpack.c.b16 %v2105, %v2101
    %v2382 = vpack.c.b16 %v2106, %v2102
    %v2383 = vpack.c.b16 %v2111, %v2107
    %v2384 = vpack.c.b16 %v2112, %v2108
    %v2385 = vpack.c.b16 %v2113, %v2109
    %v2386 = vpack.c.b16 %v2114, %v2110
    %v2387 = vpack.c.b16 %v2119, %v2115
    %v2388 = vpack.c.b16 %v2120, %v2116
    %v2389 = vpack.c.b16 %v2121, %v2117
    %v2390 = vpack.c.b16 %v2122, %v2118
    %v2391 = vpack.c.b16 %v2127, %v2123
    %v2392 = vpack.c.b16 %v2128, %v2124
    %v2393 = vpack.c.b16 %v2129, %v2125
    %v2394 = vpack.c.b16 %v2130, %v2126
    %v2395 = vpack.c.b16 %v2135, %v2131
    %v2396 = vpack.c.b16 %v2136, %v2132
    %v2397 = vpack.c.b16 %v2137, %v2133
    %v2398 = vpack.c.b16 %v2138, %v2134
    %v2399 = vpack.c.b16 %v2143, %v2139
    %v2400 = vpack.c.b16 %v2144, %v2140
    %v2401 = vpack.c.b16 %v2145, %v2141
    %v2402 = vpack.c.b16 %v2146, %v2142
    %2659 = vmatpush.bf16.msra.mxu0 %v2175
    %2660 = vmatpush.bf16.msra.mxu0 %v2171
    %2661 = vmatpush.bf16.msra.mxu0 %v2167
    %2662 = vmatpush.bf16.msra.mxu0 %v2163
    %2663 = vmatpush.bf16.msra.mxu0 %v2159
    %2664 = vmatpush.bf16.msra.mxu0 %v2155
    %2665 = vmatpush.bf16.msra.mxu0 %v2151
    %2666 = vmatpush.bf16.msra.mxu0 %v2147
    %2667 = vmatmul.bf16.gmra.mxu0 %v1105
    %v2668 = vpop.f32.mrf.mxu0
    %v2669 = vadd.f32 %v1371, %v2668
    %v2670 = vpop.f32.mrf.mxu0
    %v2671 = vadd.f32 %v1371, %v2670
    %2672 = vdwg.mxu0
    %2673 = vmatpush.bf16.msra.mxu0 %v2207
    %2674 = vmatpush.bf16.msra.mxu0 %v2203
    %2675 = vmatpush.bf16.msra.mxu0 %v2199
    %2676 = vmatpush.bf16.msra.mxu0 %v2195
    %2677 = vmatpush.bf16.msra.mxu0 %v2191
    %2678 = vmatpush.bf16.msra.mxu0 %v2187
    %2679 = vmatpush.bf16.msra.mxu0 %v2183
    %2680 = vmatpush.bf16.msra.mxu0 %v2179
    %2681 = vmatmul.bf16.gmra.mxu0 %v1106
    %v2682 = vpop.f32.mrf.mxu0
    %v2683 = vadd.f32 %v2669, %v2682
    %v2684 = vpop.f32.mrf.mxu0
    %v2685 = vadd.f32 %v2671, %v2684
    %2686 = vdwg.mxu0
    %2687 = vmatpush.bf16.msra.mxu0 %v2239
    %2688 = vmatpush.bf16.msra.mxu0 %v2235
    %2689 = vmatpush.bf16.msra.mxu0 %v2231
    %2690 = vmatpush.bf16.msra.mxu0 %v2227
    %2691 = vmatpush.bf16.msra.mxu0 %v2223
    %2692 = vmatpush.bf16.msra.mxu0 %v2219
    %2693 = vmatpush.bf16.msra.mxu0 %v2215
    %2694 = vmatpush.bf16.msra.mxu0 %v2211
    %2695 = vmatmul.bf16.gmra.mxu0 %v1107
    %v2696 = vpop.f32.mrf.mxu0
    %v2697 = vadd.f32 %v2683, %v2696
    %v2698 = vpop.f32.mrf.mxu0
    %v2699 = vadd.f32 %v2685, %v2698
    %2700 = vdwg.mxu0
    %2701 = vmatpush.bf16.msra.mxu0 %v2271
    %2702 = vmatpush.bf16.msra.mxu0 %v2267
    %2703 = vmatpush.bf16.msra.mxu0 %v2263
    %2704 = vmatpush.bf16.msra.mxu0 %v2259
    %2705 = vmatpush.bf16.msra.mxu0 %v2255
    %2706 = vmatpush.bf16.msra.mxu0 %v2251
    %2707 = vmatpush.bf16.msra.mxu0 %v2247
    %2708 = vmatpush.bf16.msra.mxu0 %v2243
    %2709 = vmatmul.bf16.gmra.mxu0 %v1108
    %v2710 = vpop.f32.mrf.mxu0
    %v2711 = vadd.f32 %v2697, %v2710
    %v2712 = vpop.f32.mrf.mxu0
    %v2713 = vadd.f32 %v2699, %v2712
    %2714 = vdwg.mxu0
    %2715 = vmatpush.bf16.msra.mxu0 %v2303
    %2716 = vmatpush.bf16.msra.mxu0 %v2299
    %2717 = vmatpush.bf16.msra.mxu0 %v2295
    %2718 = vmatpush.bf16.msra.mxu0 %v2291
    %2719 = vmatpush.bf16.msra.mxu0 %v2287
    %2720 = vmatpush.bf16.msra.mxu0 %v2283
    %2721 = vmatpush.bf16.msra.mxu0 %v2279
    %2722 = vmatpush.bf16.msra.mxu0 %v2275
    %2723 = vmatmul.bf16.gmra.mxu0 %v1109
    %v2724 = vpop.f32.mrf.mxu0
    %v2725 = vadd.f32 %v2711, %v2724
    %v2726 = vpop.f32.mrf.mxu0
    %v2727 = vadd.f32 %v2713, %v2726
    %2728 = vdwg.mxu0
    %2729 = vmatpush.bf16.msra.mxu0 %v2335
    %2730 = vmatpush.bf16.msra.mxu0 %v2331
    %2731 = vmatpush.bf16.msra.mxu0 %v2327
    %2732 = vmatpush.bf16.msra.mxu0 %v2323
    %2733 = vmatpush.bf16.msra.mxu0 %v2319
    %2734 = vmatpush.bf16.msra.mxu0 %v2315
    %2735 = vmatpush.bf16.msra.mxu0 %v2311
    %2736 = vmatpush.bf16.msra.mxu0 %v2307
    %2737 = vmatmul.bf16.gmra.mxu0 %v1110
    %v2738 = vpop.f32.mrf.mxu0
    %v2739 = vadd.f32 %v2725, %v2738
    %v2740 = vpop.f32.mrf.mxu0
    %v2741 = vadd.f32 %v2727, %v2740
    %2742 = vdwg.mxu0
    %2743 = vmatpush.bf16.msra.mxu0 %v2367
    %2744 = vmatpush.bf16.msra.mxu0 %v2363
    %2745 = vmatpush.bf16.msra.mxu0 %v2359
    %2746 = vmatpush.bf16.msra.mxu0 %v2355
    %2747 = vmatpush.bf16.msra.mxu0 %v2351
    %2748 = vmatpush.bf16.msra.mxu0 %v2347
    %2749 = vmatpush.bf16.msra.mxu0 %v2343
    %2750 = vmatpush.bf16.msra.mxu0 %v2339
    %2751 = vmatmul.bf16.gmra.mxu0 %v1111
    %v2752 = vpop.f32.mrf.mxu0
    %v2753 = vadd.f32 %v2739, %v2752
    %v2754 = vpop.f32.mrf.mxu0
    %v2755 = vadd.f32 %v2741, %v2754
    %2756 = vdwg.mxu0
    %2757 = vmatpush.bf16.msra.mxu0 %v2399
    %2758 = vmatpush.bf16.msra.mxu0 %v2395
    %2759 = vmatpush.bf16.msra.mxu0 %v2391
    %2760 = vmatpush.bf16.msra.mxu0 %v2387
    %2761 = vmatpush.bf16.msra.mxu0 %v2383
    %2762 = vmatpush.bf16.msra.mxu0 %v2379
    %2763 = vmatpush.bf16.msra.mxu0 %v2375
    %2764 = vmatpush.bf16.msra.mxu0 %v2371
    %2765 = vmatmul.bf16.gmra.mxu0 %v1112
    %v2766 = vpop.f32.mrf.mxu0
    %v2767 = vadd.f32 %v2753, %v2766
    %v2768 = vpop.f32.mrf.mxu0
    %v2769 = vadd.f32 %v2755, %v2768
    %2770 = vdwg.mxu0
    %2771 = vmatpush.bf16.msra.mxu0 %v2176
    %2772 = vmatpush.bf16.msra.mxu0 %v2172
    %2773 = vmatpush.bf16.msra.mxu0 %v2168
    %2774 = vmatpush.bf16.msra.mxu0 %v2164
    %2775 = vmatpush.bf16.msra.mxu0 %v2160
    %2776 = vmatpush.bf16.msra.mxu0 %v2156
    %2777 = vmatpush.bf16.msra.mxu0 %v2152
    %2778 = vmatpush.bf16.msra.mxu0 %v2148
    %2779 = vmatmul.bf16.gmra.mxu0 %v1105
    %v2780 = vpop.f32.mrf.mxu0
    %v2781 = vadd.f32 %v1372, %v2780
    %v2782 = vpop.f32.mrf.mxu0
    %v2783 = vadd.f32 %v1372, %v2782
    %2784 = vdwg.mxu0
    %2785 = vmatpush.bf16.msra.mxu0 %v2208
    %2786 = vmatpush.bf16.msra.mxu0 %v2204
    %2787 = vmatpush.bf16.msra.mxu0 %v2200
    %2788 = vmatpush.bf16.msra.mxu0 %v2196
    %2789 = vmatpush.bf16.msra.mxu0 %v2192
    %2790 = vmatpush.bf16.msra.mxu0 %v2188
    %2791 = vmatpush.bf16.msra.mxu0 %v2184
    %2792 = vmatpush.bf16.msra.mxu0 %v2180
    %2793 = vmatmul.bf16.gmra.mxu0 %v1106
    %v2794 = vpop.f32.mrf.mxu0
    %v2795 = vadd.f32 %v2781, %v2794
    %v2796 = vpop.f32.mrf.mxu0
    %v2797 = vadd.f32 %v2783, %v2796
    %2798 = vdwg.mxu0
    %2799 = vmatpush.bf16.msra.mxu0 %v2240
    %2800 = vmatpush.bf16.msra.mxu0 %v2236
    %2801 = vmatpush.bf16.msra.mxu0 %v2232
    %2802 = vmatpush.bf16.msra.mxu0 %v2228
    %2803 = vmatpush.bf16.msra.mxu0 %v2224
    %2804 = vmatpush.bf16.msra.mxu0 %v2220
    %2805 = vmatpush.bf16.msra.mxu0 %v2216
    %2806 = vmatpush.bf16.msra.mxu0 %v2212
    %2807 = vmatmul.bf16.gmra.mxu0 %v1107
    %v2808 = vpop.f32.mrf.mxu0
    %v2809 = vadd.f32 %v2795, %v2808
    %v2810 = vpop.f32.mrf.mxu0
    %v2811 = vadd.f32 %v2797, %v2810
    %2812 = vdwg.mxu0
    %2813 = vmatpush.bf16.msra.mxu0 %v2272
    %2814 = vmatpush.bf16.msra.mxu0 %v2268
    %2815 = vmatpush.bf16.msra.mxu0 %v2264
    %2816 = vmatpush.bf16.msra.mxu0 %v2260
    %2817 = vmatpush.bf16.msra.mxu0 %v2256
    %2818 = vmatpush.bf16.msra.mxu0 %v2252
    %2819 = vmatpush.bf16.msra.mxu0 %v2248
    %2820 = vmatpush.bf16.msra.mxu0 %v2244
    %2821 = vmatmul.bf16.gmra.mxu0 %v1108
    %v2822 = vpop.f32.mrf.mxu0
    %v2823 = vadd.f32 %v2809, %v2822
    %v2824 = vpop.f32.mrf.mxu0
    %v2825 = vadd.f32 %v2811, %v2824
    %2826 = vdwg.mxu0
    %2827 = vmatpush.bf16.msra.mxu0 %v2304
    %2828 = vmatpush.bf16.msra.mxu0 %v2300
    %2829 = vmatpush.bf16.msra.mxu0 %v2296
    %2830 = vmatpush.bf16.msra.mxu0 %v2292
    %2831 = vmatpush.bf16.msra.mxu0 %v2288
    %2832 = vmatpush.bf16.msra.mxu0 %v2284
    %2833 = vmatpush.bf16.msra.mxu0 %v2280
    %2834 = vmatpush.bf16.msra.mxu0 %v2276
    %2835 = vmatmul.bf16.gmra.mxu0 %v1109
    %v2836 = vpop.f32.mrf.mxu0
    %v2837 = vadd.f32 %v2823, %v2836
    %v2838 = vpop.f32.mrf.mxu0
    %v2839 = vadd.f32 %v2825, %v2838
    %2840 = vdwg.mxu0
    %2841 = vmatpush.bf16.msra.mxu0 %v2336
    %2842 = vmatpush.bf16.msra.mxu0 %v2332
    %2843 = vmatpush.bf16.msra.mxu0 %v2328
    %2844 = vmatpush.bf16.msra.mxu0 %v2324
    %2845 = vmatpush.bf16.msra.mxu0 %v2320
    %2846 = vmatpush.bf16.msra.mxu0 %v2316
    %2847 = vmatpush.bf16.msra.mxu0 %v2312
    %2848 = vmatpush.bf16.msra.mxu0 %v2308
    %2849 = vmatmul.bf16.gmra.mxu0 %v1110
    %v2850 = vpop.f32.mrf.mxu0
    %v2851 = vadd.f32 %v2837, %v2850
    %v2852 = vpop.f32.mrf.mxu0
    %v2853 = vadd.f32 %v2839, %v2852
    %2854 = vdwg.mxu0
    %2855 = vmatpush.bf16.msra.mxu0 %v2368
    %2856 = vmatpush.bf16.msra.mxu0 %v2364
    %2857 = vmatpush.bf16.msra.mxu0 %v2360
    %2858 = vmatpush.bf16.msra.mxu0 %v2356
    %2859 = vmatpush.bf16.msra.mxu0 %v2352
    %2860 = vmatpush.bf16.msra.mxu0 %v2348
    %2861 = vmatpush.bf16.msra.mxu0 %v2344
    %2862 = vmatpush.bf16.msra.mxu0 %v2340
    %2863 = vmatmul.bf16.gmra.mxu0 %v1111
    %v2864 = vpop.f32.mrf.mxu0
    %v2865 = vadd.f32 %v2851, %v2864
    %v2866 = vpop.f32.mrf.mxu0
    %v2867 = vadd.f32 %v2853, %v2866
    %2868 = vdwg.mxu0
    %2869 = vmatpush.bf16.msra.mxu0 %v2400
    %2870 = vmatpush.bf16.msra.mxu0 %v2396
    %2871 = vmatpush.bf16.msra.mxu0 %v2392
    %2872 = vmatpush.bf16.msra.mxu0 %v2388
    %2873 = vmatpush.bf16.msra.mxu0 %v2384
    %2874 = vmatpush.bf16.msra.mxu0 %v2380
    %2875 = vmatpush.bf16.msra.mxu0 %v2376
    %2876 = vmatpush.bf16.msra.mxu0 %v2372
    %2877 = vmatmul.bf16.gmra.mxu0 %v1112
    %v2878 = vpop.f32.mrf.mxu0
    %v2879 = vadd.f32 %v2865, %v2878
    %v2880 = vpop.f32.mrf.mxu0
    %v2881 = vadd.f32 %v2867, %v2880
    %2882 = vdwg.mxu0
    %2883 = vmatpush.bf16.msra.mxu0 %v2177
    %2884 = vmatpush.bf16.msra.mxu0 %v2173
    %2885 = vmatpush.bf16.msra.mxu0 %v2169
    %2886 = vmatpush.bf16.msra.mxu0 %v2165
    %2887 = vmatpush.bf16.msra.mxu0 %v2161
    %2888 = vmatpush.bf16.msra.mxu0 %v2157
    %2889 = vmatpush.bf16.msra.mxu0 %v2153
    %2890 = vmatpush.bf16.msra.mxu0 %v2149
    %2891 = vmatmul.bf16.gmra.mxu0 %v1105
    %v2892 = vpop.f32.mrf.mxu0
    %v2893 = vadd.f32 %v1373, %v2892
    %v2894 = vpop.f32.mrf.mxu0
    %v2895 = vadd.f32 %v1373, %v2894
    %2896 = vdwg.mxu0
    %2897 = vmatpush.bf16.msra.mxu0 %v2209
    %2898 = vmatpush.bf16.msra.mxu0 %v2205
    %2899 = vmatpush.bf16.msra.mxu0 %v2201
    %2900 = vmatpush.bf16.msra.mxu0 %v2197
    %2901 = vmatpush.bf16.msra.mxu0 %v2193
    %2902 = vmatpush.bf16.msra.mxu0 %v2189
    %2903 = vmatpush.bf16.msra.mxu0 %v2185
    %2904 = vmatpush.bf16.msra.mxu0 %v2181
    %2905 = vmatmul.bf16.gmra.mxu0 %v1106
    %v2906 = vpop.f32.mrf.mxu0
    %v2907 = vadd.f32 %v2893, %v2906
    %v2908 = vpop.f32.mrf.mxu0
    %v2909 = vadd.f32 %v2895, %v2908
    %2910 = vdwg.mxu0
    %2911 = vmatpush.bf16.msra.mxu0 %v2241
    %2912 = vmatpush.bf16.msra.mxu0 %v2237
    %2913 = vmatpush.bf16.msra.mxu0 %v2233
    %2914 = vmatpush.bf16.msra.mxu0 %v2229
    %2915 = vmatpush.bf16.msra.mxu0 %v2225
    %2916 = vmatpush.bf16.msra.mxu0 %v2221
    %2917 = vmatpush.bf16.msra.mxu0 %v2217
    %2918 = vmatpush.bf16.msra.mxu0 %v2213
    %2919 = vmatmul.bf16.gmra.mxu0 %v1107
    %v2920 = vpop.f32.mrf.mxu0
    %v2921 = vadd.f32 %v2907, %v2920
    %v2922 = vpop.f32.mrf.mxu0
    %v2923 = vadd.f32 %v2909, %v2922
    %2924 = vdwg.mxu0
    %2925 = vmatpush.bf16.msra.mxu0 %v2273
    %2926 = vmatpush.bf16.msra.mxu0 %v2269
    %2927 = vmatpush.bf16.msra.mxu0 %v2265
    %2928 = vmatpush.bf16.msra.mxu0 %v2261
    %2929 = vmatpush.bf16.msra.mxu0 %v2257
    %2930 = vmatpush.bf16.msra.mxu0 %v2253
    %2931 = vmatpush.bf16.msra.mxu0 %v2249
    %2932 = vmatpush.bf16.msra.mxu0 %v2245
    %2933 = vmatmul.bf16.gmra.mxu0 %v1108
    %v2934 = vpop.f32.mrf.mxu0
    %v2935 = vadd.f32 %v2921, %v2934
    %v2936 = vpop.f32.mrf.mxu0
    %v2937 = vadd.f32 %v2923, %v2936
    %2938 = vdwg.mxu0
    %2939 = vmatpush.bf16.msra.mxu0 %v2305
    %2940 = vmatpush.bf16.msra.mxu0 %v2301
    %2941 = vmatpush.bf16.msra.mxu0 %v2297
    %2942 = vmatpush.bf16.msra.mxu0 %v2293
    %2943 = vmatpush.bf16.msra.mxu0 %v2289
    %2944 = vmatpush.bf16.msra.mxu0 %v2285
    %2945 = vmatpush.bf16.msra.mxu0 %v2281
    %2946 = vmatpush.bf16.msra.mxu0 %v2277
    %2947 = vmatmul.bf16.gmra.mxu0 %v1109
    %v2948 = vpop.f32.mrf.mxu0
    %v2949 = vadd.f32 %v2935, %v2948
    %v2950 = vpop.f32.mrf.mxu0
    %v2951 = vadd.f32 %v2937, %v2950
    %2952 = vdwg.mxu0
    %2953 = vmatpush.bf16.msra.mxu0 %v2337
    %2954 = vmatpush.bf16.msra.mxu0 %v2333
    %2955 = vmatpush.bf16.msra.mxu0 %v2329
    %2956 = vmatpush.bf16.msra.mxu0 %v2325
    %2957 = vmatpush.bf16.msra.mxu0 %v2321
    %2958 = vmatpush.bf16.msra.mxu0 %v2317
    %2959 = vmatpush.bf16.msra.mxu0 %v2313
    %2960 = vmatpush.bf16.msra.mxu0 %v2309
    %2961 = vmatmul.bf16.gmra.mxu0 %v1110
    %v2962 = vpop.f32.mrf.mxu0
    %v2963 = vadd.f32 %v2949, %v2962
    %v2964 = vpop.f32.mrf.mxu0
    %v2965 = vadd.f32 %v2951, %v2964
    %2966 = vdwg.mxu0
    %2967 = vmatpush.bf16.msra.mxu0 %v2369
    %2968 = vmatpush.bf16.msra.mxu0 %v2365
    %2969 = vmatpush.bf16.msra.mxu0 %v2361
    %2970 = vmatpush.bf16.msra.mxu0 %v2357
    %2971 = vmatpush.bf16.msra.mxu0 %v2353
    %2972 = vmatpush.bf16.msra.mxu0 %v2349
    %2973 = vmatpush.bf16.msra.mxu0 %v2345
    %2974 = vmatpush.bf16.msra.mxu0 %v2341
    %2975 = vmatmul.bf16.gmra.mxu0 %v1111
    %v2976 = vpop.f32.mrf.mxu0
    %v2977 = vadd.f32 %v2963, %v2976
    %v2978 = vpop.f32.mrf.mxu0
    %v2979 = vadd.f32 %v2965, %v2978
    %2980 = vdwg.mxu0
    %2981 = vmatpush.bf16.msra.mxu0 %v2401
    %2982 = vmatpush.bf16.msra.mxu0 %v2397
    %2983 = vmatpush.bf16.msra.mxu0 %v2393
    %2984 = vmatpush.bf16.msra.mxu0 %v2389
    %2985 = vmatpush.bf16.msra.mxu0 %v2385
    %2986 = vmatpush.bf16.msra.mxu0 %v2381
    %2987 = vmatpush.bf16.msra.mxu0 %v2377
    %2988 = vmatpush.bf16.msra.mxu0 %v2373
    %2989 = vmatmul.bf16.gmra.mxu0 %v1112
    %v2990 = vpop.f32.mrf.mxu0
    %v2991 = vadd.f32 %v2977, %v2990
    %v2992 = vpop.f32.mrf.mxu0
    %v2993 = vadd.f32 %v2979, %v2992
    %2994 = vdwg.mxu0
    %2995 = vmatpush.bf16.msra.mxu0 %v2178
    %2996 = vmatpush.bf16.msra.mxu0 %v2174
    %2997 = vmatpush.bf16.msra.mxu0 %v2170
    %2998 = vmatpush.bf16.msra.mxu0 %v2166
    %2999 = vmatpush.bf16.msra.mxu0 %v2162
    %3000 = vmatpush.bf16.msra.mxu0 %v2158
    %3001 = vmatpush.bf16.msra.mxu0 %v2154
    %3002 = vmatpush.bf16.msra.mxu0 %v2150
    %3003 = vmatmul.bf16.gmra.mxu0 %v1105
    %v3004 = vpop.f32.mrf.mxu0
    %v3005 = vadd.f32 %v1374, %v3004
    %v3006 = vpop.f32.mrf.mxu0
    %v3007 = vadd.f32 %v1374, %v3006
    %3008 = vdwg.mxu0
    %3009 = vmatpush.bf16.msra.mxu0 %v2210
    %3010 = vmatpush.bf16.msra.mxu0 %v2206
    %3011 = vmatpush.bf16.msra.mxu0 %v2202
    %3012 = vmatpush.bf16.msra.mxu0 %v2198
    %3013 = vmatpush.bf16.msra.mxu0 %v2194
    %3014 = vmatpush.bf16.msra.mxu0 %v2190
    %3015 = vmatpush.bf16.msra.mxu0 %v2186
    %3016 = vmatpush.bf16.msra.mxu0 %v2182
    %3017 = vmatmul.bf16.gmra.mxu0 %v1106
    %v3018 = vpop.f32.mrf.mxu0
    %v3019 = vadd.f32 %v3005, %v3018
    %v3020 = vpop.f32.mrf.mxu0
    %v3021 = vadd.f32 %v3007, %v3020
    %3022 = vdwg.mxu0
    %3023 = vmatpush.bf16.msra.mxu0 %v2242
    %3024 = vmatpush.bf16.msra.mxu0 %v2238
    %3025 = vmatpush.bf16.msra.mxu0 %v2234
    %3026 = vmatpush.bf16.msra.mxu0 %v2230
    %3027 = vmatpush.bf16.msra.mxu0 %v2226
    %3028 = vmatpush.bf16.msra.mxu0 %v2222
    %3029 = vmatpush.bf16.msra.mxu0 %v2218
    %3030 = vmatpush.bf16.msra.mxu0 %v2214
    %3031 = vmatmul.bf16.gmra.mxu0 %v1107
    %v3032 = vpop.f32.mrf.mxu0
    %v3033 = vadd.f32 %v3019, %v3032
    %v3034 = vpop.f32.mrf.mxu0
    %v3035 = vadd.f32 %v3021, %v3034
    %3036 = vdwg.mxu0
    %3037 = vmatpush.bf16.msra.mxu0 %v2274
    %3038 = vmatpush.bf16.msra.mxu0 %v2270
    %3039 = vmatpush.bf16.msra.mxu0 %v2266
    %3040 = vmatpush.bf16.msra.mxu0 %v2262
    %3041 = vmatpush.bf16.msra.mxu0 %v2258
    %3042 = vmatpush.bf16.msra.mxu0 %v2254
    %3043 = vmatpush.bf16.msra.mxu0 %v2250
    %3044 = vmatpush.bf16.msra.mxu0 %v2246
    %3045 = vmatmul.bf16.gmra.mxu0 %v1108
    %v3046 = vpop.f32.mrf.mxu0
    %v3047 = vadd.f32 %v3033, %v3046
    %v3048 = vpop.f32.mrf.mxu0
    %v3049 = vadd.f32 %v3035, %v3048
    %3050 = vdwg.mxu0
    %3051 = vmatpush.bf16.msra.mxu0 %v2306
    %3052 = vmatpush.bf16.msra.mxu0 %v2302
    %3053 = vmatpush.bf16.msra.mxu0 %v2298
    %3054 = vmatpush.bf16.msra.mxu0 %v2294
    %3055 = vmatpush.bf16.msra.mxu0 %v2290
    %3056 = vmatpush.bf16.msra.mxu0 %v2286
    %3057 = vmatpush.bf16.msra.mxu0 %v2282
    %3058 = vmatpush.bf16.msra.mxu0 %v2278
    %3059 = vmatmul.bf16.gmra.mxu0 %v1109
    %v3060 = vpop.f32.mrf.mxu0
    %v3061 = vadd.f32 %v3047, %v3060
    %v3062 = vpop.f32.mrf.mxu0
    %v3063 = vadd.f32 %v3049, %v3062
    %3064 = vdwg.mxu0
    %3065 = vmatpush.bf16.msra.mxu0 %v2338
    %3066 = vmatpush.bf16.msra.mxu0 %v2334
    %3067 = vmatpush.bf16.msra.mxu0 %v2330
    %3068 = vmatpush.bf16.msra.mxu0 %v2326
    %3069 = vmatpush.bf16.msra.mxu0 %v2322
    %3070 = vmatpush.bf16.msra.mxu0 %v2318
    %3071 = vmatpush.bf16.msra.mxu0 %v2314
    %3072 = vmatpush.bf16.msra.mxu0 %v2310
    %3073 = vmatmul.bf16.gmra.mxu0 %v1110
    %v3074 = vpop.f32.mrf.mxu0
    %v3075 = vadd.f32 %v3061, %v3074
    %v3076 = vpop.f32.mrf.mxu0
    %v3077 = vadd.f32 %v3063, %v3076
    %3078 = vdwg.mxu0
    %3079 = vmatpush.bf16.msra.mxu0 %v2370
    %3080 = vmatpush.bf16.msra.mxu0 %v2366
    %3081 = vmatpush.bf16.msra.mxu0 %v2362
    %3082 = vmatpush.bf16.msra.mxu0 %v2358
    %3083 = vmatpush.bf16.msra.mxu0 %v2354
    %3084 = vmatpush.bf16.msra.mxu0 %v2350
    %3085 = vmatpush.bf16.msra.mxu0 %v2346
    %3086 = vmatpush.bf16.msra.mxu0 %v2342
    %3087 = vmatmul.bf16.gmra.mxu0 %v1111
    %v3088 = vpop.f32.mrf.mxu0
    %v3089 = vadd.f32 %v3075, %v3088
    %v3090 = vpop.f32.mrf.mxu0
    %v3091 = vadd.f32 %v3077, %v3090
    %3092 = vdwg.mxu0
    %3093 = vmatpush.bf16.msra.mxu0 %v2402
    %3094 = vmatpush.bf16.msra.mxu0 %v2398
    %3095 = vmatpush.bf16.msra.mxu0 %v2394
    %3096 = vmatpush.bf16.msra.mxu0 %v2390
    %3097 = vmatpush.bf16.msra.mxu0 %v2386
    %3098 = vmatpush.bf16.msra.mxu0 %v2382
    %3099 = vmatpush.bf16.msra.mxu0 %v2378
    %3100 = vmatpush.bf16.msra.mxu0 %v2374
    %3101 = vmatmul.bf16.gmra.mxu0 %v1112
    %v3102 = vpop.f32.mrf.mxu0
    %v3103 = vadd.f32 %v3089, %v3102
    %v3104 = vpop.f32.mrf.mxu0
    %v3105 = vadd.f32 %v3091, %v3104
    %3106 = vdwg.mxu0
    %v3107 = vmax.f32 %v2767, 0.0
    %v3108 = vmax.f32 %v2879, 0.0
    %v3109 = vmax.f32 %v2991, 0.0
    %v3110 = vmax.f32 %v3103, 0.0
    %v3111 = vmax.f32 %v2769, 0.0
    %v3112 = vmax.f32 %v2881, 0.0
    %v3113 = vmax.f32 %v2993, 0.0
    %v3114 = vmax.f32 %v3105, 0.0
    %v3115 = vpack.c.bf16 %v3111, %v3107
    %v3116 = vpack.c.bf16 %v3112, %v3108
    %v3117 = vpack.c.bf16 %v3113, %v3109
    %v3118 = vpack.c.bf16 %v3114, %v3110
    %v3119 = vld [vmem:[#allocation6] sm:$0xf]
    %v3120 = vld [vmem:[#allocation6 + $0x4] sm:$0xf]
    %v3121 = vld [vmem:[#allocation6 + $0x8] sm:$0xf]
    %v3122 = vld [vmem:[#allocation6 + $0xc] sm:$0xf]
    %v3123 = vld [vmem:[#allocation6 + $0x10] sm:$0xf]
    %v3124 = vld [vmem:[#allocation6 + $0x14] sm:$0xf]
    %v3125 = vld [vmem:[#allocation6 + $0x18] sm:$0xf]
    %v3126 = vld [vmem:[#allocation6 + $0x1c] sm:$0xf]
    %v3127 = vld [vmem:[#allocation6 + $0x20] sm:$0xf]
    %v3128 = vld [vmem:[#allocation6 + $0x24] sm:$0xf]
    %v3129 = vld [vmem:[#allocation6 + $0x28] sm:$0xf]
    %v3130 = vld [vmem:[#allocation6 + $0x2c] sm:$0xf]
    %v3131 = vld [vmem:[#allocation6 + $0x30] sm:$0xf]
    %v3132 = vld [vmem:[#allocation6 + $0x34] sm:$0xf]
    %v3133 = vld [vmem:[#allocation6 + $0x38] sm:$0xf]
    %v3134 = vld [vmem:[#allocation6 + $0x3c] sm:$0xf]
    %v3135 = vld [vmem:[#allocation6 + $0x40] sm:$0xf]
    %v3136 = vld [vmem:[#allocation6 + $0x44] sm:$0xf]
    %v3137 = vld [vmem:[#allocation6 + $0x48] sm:$0xf]
    %v3138 = vld [vmem:[#allocation6 + $0x4c] sm:$0xf]
    %v3139 = vld [vmem:[#allocation6 + $0x50] sm:$0xf]
    %v3140 = vld [vmem:[#allocation6 + $0x54] sm:$0xf]
    %v3141 = vld [vmem:[#allocation6 + $0x58] sm:$0xf]
    %v3142 = vld [vmem:[#allocation6 + $0x5c] sm:$0xf]
    %v3143 = vld [vmem:[#allocation6 + $0x60] sm:$0xf]
    %v3144 = vld [vmem:[#allocation6 + $0x64] sm:$0xf]
    %v3145 = vld [vmem:[#allocation6 + $0x68] sm:$0xf]
    %v3146 = vld [vmem:[#allocation6 + $0x6c] sm:$0xf]
    %v3147 = vld [vmem:[#allocation6 + $0x70] sm:$0xf]
    %v3148 = vld [vmem:[#allocation6 + $0x74] sm:$0xf]
    %v3149 = vld [vmem:[#allocation6 + $0x78] sm:$0xf]
    %v3150 = vld [vmem:[#allocation6 + $0x7c] sm:$0xf]
    %v3151 = vld [vmem:[#allocation6 + $0x80] sm:$0xf]
    %v3152 = vld [vmem:[#allocation6 + $0x84] sm:$0xf]
    %v3153 = vld [vmem:[#allocation6 + $0x88] sm:$0xf]
    %v3154 = vld [vmem:[#allocation6 + $0x8c] sm:$0xf]
    %v3155 = vld [vmem:[#allocation6 + $0x90] sm:$0xf]
    %v3156 = vld [vmem:[#allocation6 + $0x94] sm:$0xf]
    %v3157 = vld [vmem:[#allocation6 + $0x98] sm:$0xf]
    %v3158 = vld [vmem:[#allocation6 + $0x9c] sm:$0xf]
    %v3159 = vld [vmem:[#allocation6 + $0xa0] sm:$0xf]
    %v3160 = vld [vmem:[#allocation6 + $0xa4] sm:$0xf]
    %v3161 = vld [vmem:[#allocation6 + $0xa8] sm:$0xf]
    %v3162 = vld [vmem:[#allocation6 + $0xac] sm:$0xf]
    %v3163 = vld [vmem:[#allocation6 + $0xb0] sm:$0xf]
    %v3164 = vld [vmem:[#allocation6 + $0xb4] sm:$0xf]
    %v3165 = vld [vmem:[#allocation6 + $0xb8] sm:$0xf]
    %v3166 = vld [vmem:[#allocation6 + $0xbc] sm:$0xf]
    %v3167 = vld [vmem:[#allocation6 + $0xc0] sm:$0xf]
    %v3168 = vld [vmem:[#allocation6 + $0xc4] sm:$0xf]
    %v3169 = vld [vmem:[#allocation6 + $0xc8] sm:$0xf]
    %v3170 = vld [vmem:[#allocation6 + $0xcc] sm:$0xf]
    %v3171 = vld [vmem:[#allocation6 + $0xd0] sm:$0xf]
    %v3172 = vld [vmem:[#allocation6 + $0xd4] sm:$0xf]
    %v3173 = vld [vmem:[#allocation6 + $0xd8] sm:$0xf]
    %v3174 = vld [vmem:[#allocation6 + $0xdc] sm:$0xf]
    %v3175 = vld [vmem:[#allocation6 + $0xe0] sm:$0xf]
    %v3176 = vld [vmem:[#allocation6 + $0xe4] sm:$0xf]
    %v3177 = vld [vmem:[#allocation6 + $0xe8] sm:$0xf]
    %v3178 = vld [vmem:[#allocation6 + $0xec] sm:$0xf]
    %v3179 = vld [vmem:[#allocation6 + $0xf0] sm:$0xf]
    %v3180 = vld [vmem:[#allocation6 + $0xf4] sm:$0xf]
    %v3181 = vld [vmem:[#allocation6 + $0xf8] sm:$0xf]
    %v3182 = vld [vmem:[#allocation6 + $0xfc] sm:$0xf]
    %v3183 = vld [vmem:[%s6] sm:$0x1]
    %v3185 = vperm.slane %v3183, 0
    %v3251 = vunpack.c.l.b16 %v3119
    %v3252 = vunpack.c.l.b16 %v3120
    %v3253 = vunpack.c.l.b16 %v3121
    %v3254 = vunpack.c.l.b16 %v3122
    %v3255 = vunpack.c.l.b16 %v3123
    %v3256 = vunpack.c.l.b16 %v3124
    %v3257 = vunpack.c.l.b16 %v3125
    %v3258 = vunpack.c.l.b16 %v3126
    %v3259 = vunpack.c.l.b16 %v3127
    %v3260 = vunpack.c.l.b16 %v3128
    %v3261 = vunpack.c.l.b16 %v3129
    %v3262 = vunpack.c.l.b16 %v3130
    %v3263 = vunpack.c.l.b16 %v3131
    %v3264 = vunpack.c.l.b16 %v3132
    %v3265 = vunpack.c.l.b16 %v3133
    %v3266 = vunpack.c.l.b16 %v3134
    %v3267 = vunpack.c.l.b16 %v3135
    %v3268 = vunpack.c.l.b16 %v3136
    %v3269 = vunpack.c.l.b16 %v3137
    %v3270 = vunpack.c.l.b16 %v3138
    %v3271 = vunpack.c.l.b16 %v3139
    %v3272 = vunpack.c.l.b16 %v3140
    %v3273 = vunpack.c.l.b16 %v3141
    %v3274 = vunpack.c.l.b16 %v3142
    %v3275 = vunpack.c.l.b16 %v3143
    %v3276 = vunpack.c.l.b16 %v3144
    %v3277 = vunpack.c.l.b16 %v3145
    %v3278 = vunpack.c.l.b16 %v3146
    %v3279 = vunpack.c.l.b16 %v3147
    %v3280 = vunpack.c.l.b16 %v3148
    %v3281 = vunpack.c.l.b16 %v3149
    %v3282 = vunpack.c.l.b16 %v3150
    %v3283 = vunpack.c.l.b16 %v3151
    %v3284 = vunpack.c.l.b16 %v3152
    %v3285 = vunpack.c.l.b16 %v3153
    %v3286 = vunpack.c.l.b16 %v3154
    %v3287 = vunpack.c.l.b16 %v3155
    %v3288 = vunpack.c.l.b16 %v3156
    %v3289 = vunpack.c.l.b16 %v3157
    %v3290 = vunpack.c.l.b16 %v3158
    %v3291 = vunpack.c.l.b16 %v3159
    %v3292 = vunpack.c.l.b16 %v3160
    %v3293 = vunpack.c.l.b16 %v3161
    %v3294 = vunpack.c.l.b16 %v3162
    %v3295 = vunpack.c.l.b16 %v3163
    %v3296 = vunpack.c.l.b16 %v3164
    %v3297 = vunpack.c.l.b16 %v3165
    %v3298 = vunpack.c.l.b16 %v3166
    %v3299 = vunpack.c.l.b16 %v3167
    %v3300 = vunpack.c.l.b16 %v3168
    %v3301 = vunpack.c.l.b16 %v3169
    %v3302 = vunpack.c.l.b16 %v3170
    %v3303 = vunpack.c.l.b16 %v3171
    %v3304 = vunpack.c.l.b16 %v3172
    %v3305 = vunpack.c.l.b16 %v3173
    %v3306 = vunpack.c.l.b16 %v3174
    %v3307 = vunpack.c.l.b16 %v3175
    %v3308 = vunpack.c.l.b16 %v3176
    %v3309 = vunpack.c.l.b16 %v3177
    %v3310 = vunpack.c.l.b16 %v3178
    %v3311 = vunpack.c.l.b16 %v3179
    %v3312 = vunpack.c.l.b16 %v3180
    %v3313 = vunpack.c.l.b16 %v3181
    %v3314 = vunpack.c.l.b16 %v3182
    %v3315 = vpack.c.b16 %v3252, %v3251
    %v3316 = vpack.c.b16 %v3254, %v3253
    %v3317 = vpack.c.b16 %v3256, %v3255
    %v3318 = vpack.c.b16 %v3258, %v3257
    %v3319 = vpack.c.b16 %v3260, %v3259
    %v3320 = vpack.c.b16 %v3262, %v3261
    %v3321 = vpack.c.b16 %v3264, %v3263
    %v3322 = vpack.c.b16 %v3266, %v3265
    %v3323 = vpack.c.b16 %v3268, %v3267
    %v3324 = vpack.c.b16 %v3270, %v3269
    %v3325 = vpack.c.b16 %v3272, %v3271
    %v3326 = vpack.c.b16 %v3274, %v3273
    %v3327 = vpack.c.b16 %v3276, %v3275
    %v3328 = vpack.c.b16 %v3278, %v3277
    %v3329 = vpack.c.b16 %v3280, %v3279
    %v3330 = vpack.c.b16 %v3282, %v3281
    %v3331 = vpack.c.b16 %v3284, %v3283
    %v3332 = vpack.c.b16 %v3286, %v3285
    %v3333 = vpack.c.b16 %v3288, %v3287
    %v3334 = vpack.c.b16 %v3290, %v3289
    %v3335 = vpack.c.b16 %v3292, %v3291
    %v3336 = vpack.c.b16 %v3294, %v3293
    %v3337 = vpack.c.b16 %v3296, %v3295
    %v3338 = vpack.c.b16 %v3298, %v3297
    %v3339 = vpack.c.b16 %v3300, %v3299
    %v3340 = vpack.c.b16 %v3302, %v3301
    %v3341 = vpack.c.b16 %v3304, %v3303
    %v3342 = vpack.c.b16 %v3306, %v3305
    %v3343 = vpack.c.b16 %v3308, %v3307
    %v3344 = vpack.c.b16 %v3310, %v3309
    %v3345 = vpack.c.b16 %v3312, %v3311
    %v3346 = vpack.c.b16 %v3314, %v3313
    %3379 = vmatpush.bf16.msra.mxu0 %v3322
    %3380 = vmatpush.bf16.msra.mxu0 %v3321
    %3381 = vmatpush.bf16.msra.mxu0 %v3320
    %3382 = vmatpush.bf16.msra.mxu0 %v3319
    %3383 = vmatpush.bf16.msra.mxu0 %v3318
    %3384 = vmatpush.bf16.msra.mxu0 %v3317
    %3385 = vmatpush.bf16.msra.mxu0 %v3316
    %3386 = vmatpush.bf16.msra.mxu0 %v3315
    %3387 = vmatmul.bf16.gmra.mxu0 %v3115
    %v3388 = vpop.f32.mrf.mxu0
    %v3389 = vadd.f32 %v3185, %v3388
    %v3390 = vpop.f32.mrf.mxu0
    %v3391 = vadd.f32 %v3185, %v3390
    %3392 = vdwg.mxu0
    %3393 = vmatpush.bf16.msra.mxu0 %v3330
    %3394 = vmatpush.bf16.msra.mxu0 %v3329
    %3395 = vmatpush.bf16.msra.mxu0 %v3328
    %3396 = vmatpush.bf16.msra.mxu0 %v3327
    %3397 = vmatpush.bf16.msra.mxu0 %v3326
    %3398 = vmatpush.bf16.msra.mxu0 %v3325
    %3399 = vmatpush.bf16.msra.mxu0 %v3324
    %3400 = vmatpush.bf16.msra.mxu0 %v3323
    %3401 = vmatmul.bf16.gmra.mxu0 %v3116
    %v3402 = vpop.f32.mrf.mxu0
    %v3403 = vadd.f32 %v3389, %v3402
    %v3404 = vpop.f32.mrf.mxu0
    %v3405 = vadd.f32 %v3391, %v3404
    %3406 = vdwg.mxu0
    %3407 = vmatpush.bf16.msra.mxu0 %v3338
    %3408 = vmatpush.bf16.msra.mxu0 %v3337
    %3409 = vmatpush.bf16.msra.mxu0 %v3336
    %3410 = vmatpush.bf16.msra.mxu0 %v3335
    %3411 = vmatpush.bf16.msra.mxu0 %v3334
    %3412 = vmatpush.bf16.msra.mxu0 %v3333
    %3413 = vmatpush.bf16.msra.mxu0 %v3332
    %3414 = vmatpush.bf16.msra.mxu0 %v3331
    %3415 = vmatmul.bf16.gmra.mxu0 %v3117
    %v3416 = vpop.f32.mrf.mxu0
    %v3417 = vadd.f32 %v3403, %v3416
    %v3418 = vpop.f32.mrf.mxu0
    %v3419 = vadd.f32 %v3405, %v3418
    %3420 = vdwg.mxu0
    %3421 = vmatpush.bf16.msra.mxu0 %v3346
    %3422 = vmatpush.bf16.msra.mxu0 %v3345
    %3423 = vmatpush.bf16.msra.mxu0 %v3344
    %3424 = vmatpush.bf16.msra.mxu0 %v3343
    %3425 = vmatpush.bf16.msra.mxu0 %v3342
    %3426 = vmatpush.bf16.msra.mxu0 %v3341
    %3427 = vmatpush.bf16.msra.mxu0 %v3340
    %3428 = vmatpush.bf16.msra.mxu0 %v3339
    %3429 = vmatmul.bf16.gmra.mxu0 %v3118
    %v3430 = vpop.f32.mrf.mxu0
    %v3431 = vadd.f32 %v3417, %v3430
    %v3432 = vpop.f32.mrf.mxu0
    %v3433 = vadd.f32 %v3419, %v3432
    %3434 = vdwg.mxu0
    %3435 = vst [vmem:[%s7] sm:$0xff] %v3431
    %3436 = vst [vmem:[%s7 + $0x8] sm:$0xff] %v3433
    // Predicated region
    $region42: #{model_id_forward.1} parent=1 // pred_check
      _
    $region43: #{model_id_forward.1} parent=1 // pred_check_branch
      %3438 = sbr.rel (0) target = $region45
    $region44: #{model_id_forward.1} parent=1 // pred_region
      _
    $region45: #{model_id_forward.1} parent=1 // pred_fallthru
      _
    // Predicated region
    $region46: #{model_id_forward.1} parent=1 // pred_check
      _
    $region47: #{model_id_forward.1} parent=1 // pred_check_branch
      %3440 = sbr.rel (0) target = $region49
    $region48: #{model_id_forward.1} parent=1 // pred_region
      _
    $region49: #{model_id_forward.1} parent=1 // pred_fallthru
      _
    %3441 = vsyncpa [#allocation3], 1
    %3442 = vsyncpa [#allocation5], 1

</llo_original>
